<compile_context>
chip_gen: v7x
topology: tpu7x:2x2x1
jax: 0.10.0
libtpu: 0.0.40
codegen_flags: <defaults>
</compile_context>

<pallas_src>
import functools

import numpy as np
import jax
import jax.numpy as jnp
from jax.experimental import pallas as pl
from jax.experimental.pallas import tpu as pltpu

NEG_SLOPE = 0.01   # nn.LeakyReLU default
BN_EPS = 1e-5      # nn.BatchNorm1d default

# Fixed geometry of the module.
CIN, H, W = 2, 6, 7
KH, KW = 4, 4
HO, WO = H - KH + 1, W - KW + 1          # 3, 4
NPOS = HO * WO                           # 12
CMID = 32
COUT = 4
D_IN = CIN * H * W                       # 84
D_H1 = NPOS * CMID                       # 384
D_H2 = COUT * NPOS                       # 48  (torch flatten order)
D_FC = 64

# h3 cache budget, sized against v7x's 64 MiB physical VMEM (half of v5e/v6e):
# (n_pad, 64) f32 pads to 128 lanes -> n_pad * 512 B;  16 MiB ~= 32K rows.
CACHE_BUDGET_BYTES = 16 * 1024 * 1024


def _leaky(x):
    return jnp.where(x > 0, x, NEG_SLOPE * x)


def _round_up(x, m):
    return ((x + m - 1) // m) * m


# ---------------------------------------------------------------------------
# Host-side weight folding: im2col + 1x1 conv + flatten permutation -> dense
# weight matrices.  Pure wrapper-side plumbing (indices are numpy constants).
# ---------------------------------------------------------------------------
def _fold_conv_weights(c1_w, c1_b, c2_w, c2_b):
    # --- conv1 (4x4) as (84, 384): rows = torch-flattened NCHW input,
    #     columns = (pos-major, 32-channel-minor) conv1 output. ---
    i, j, cin, di, dj, cm = np.meshgrid(
        np.arange(HO), np.arange(WO), np.arange(CIN),
        np.arange(KH), np.arange(KW), np.arange(CMID), indexing="ij")
    rows1 = cin * (H * W) + (i + di) * W + (j + dj)          # input feature
    cols1 = (i * WO + j) * CMID + cm                         # pos*32 + cout
    vals1 = jnp.broadcast_to(
        c1_w.transpose(1, 2, 3, 0)[None, None], rows1.shape)  # (Cin,KH,KW,Cmid)
    w1_big = jnp.zeros((D_IN, D_H1), jnp.float32).at[rows1, cols1].set(vals1)
    b1_big = jnp.tile(c1_b, NPOS).reshape(1, D_H1)           # pos-major tiling

    # --- conv2 (1x1) as block-diagonal (384, 48) whose columns are already in
    #     torch .view(-1, 48) order: col = cout*12 + pos. ---
    p, cm2, co = np.meshgrid(np.arange(NPOS), np.arange(CMID), np.arange(COUT),
                             indexing="ij")
    rows2 = p * CMID + cm2
    cols2 = co * NPOS + p
    vals2 = jnp.broadcast_to(c2_w[:, :, 0, 0].T[None], rows2.shape)  # (Cmid,Cout)
    w2_big = jnp.zeros((D_H1, D_H2), jnp.float32).at[rows2, cols2].set(vals2)
    b2_big = jnp.repeat(c2_b, NPOS).reshape(1, D_H2)         # channel-major

    return w1_big, b1_big, w2_big, b2_big


# ---------------------------------------------------------------------------
# Shared MXU path: x -> conv1 -> LeakyReLU -> conv2 -> LeakyReLU -> fc1 (= h3)
# If W1/W2 were cast to bf16 by the wrapper, the activations feeding them are
# cast too; MXU accumulation stays f32.
# ---------------------------------------------------------------------------
def _compute_h3(x_ref, w1_ref, b1_ref, w2_ref, b2_ref, wf1_ref, bf1_ref):
    h1 = _leaky(jnp.dot(x_ref[...].astype(w1_ref.dtype), w1_ref[...],
                        preferred_element_type=jnp.float32) + b1_ref[...])
    h2 = _leaky(jnp.dot(h1.astype(w2_ref.dtype), w2_ref[...],
                        preferred_element_type=jnp.float32) + b2_ref[...])
    return jnp.dot(h2, wf1_ref[...],
                   preferred_element_type=jnp.float32) + bf1_ref[...]


# ---------------------------------------------------------------------------
# Main kernel: h3 cached in VMEM, 3 phases (matmuls+sum / centered var / out).
# Grid = (3, n_tiles); both axes sequential ("arbitrary").
# ---------------------------------------------------------------------------
def _cached_kernel(x_ref, w1_ref, b1_ref, w2_ref, b2_ref,
                   wf1_ref, bf1_ref, g_ref, be_ref, wf2_ref, bf2_ref,
                   o_ref, mean_ref, istd_ref, h3_ref,
                   *, n_valid, tile_n, n_pad):
    p = pl.program_id(0)
    t = pl.program_id(1)
    n_tiles = pl.num_programs(1)
    row0 = pl.multiple_of(t * tile_n, 8)

    def _valid_mask():  # only built when padding exists (static check below)
        rows = row0 + jax.lax.broadcasted_iota(jnp.int32, (tile_n, 1), 0)
        return (rows < n_valid).astype(jnp.float32)

    # -- phase 0: MXU matmuls once per row, cache h3, accumulate batch sum ----
    @pl.when(p == 0)
    def _phase0():
        @pl.when(t == 0)
        def _():
            mean_ref[...] = jnp.zeros_like(mean_ref)
            istd_ref[...] = jnp.zeros_like(istd_ref)
            o_ref[...] = jnp.zeros_like(o_ref)       # defensive resident init

        h3 = _compute_h3(x_ref, w1_ref, b1_ref, w2_ref, b2_ref,
                         wf1_ref, bf1_ref)
        h3_ref[pl.ds(row0, tile_n), :] = h3

        hm = h3 * _valid_mask() if n_pad != n_valid else h3
        mean_ref[...] += jnp.sum(hm, axis=0, keepdims=True)

        @pl.when(t == n_tiles - 1)
        def _():
            mean_ref[...] = mean_ref[...] * (1.0 / n_valid)

    # -- phase 1: two-pass (centered) variance from the VMEM cache (pure VPU) -
    @pl.when(p == 1)
    def _phase1():
        d = h3_ref[pl.ds(row0, tile_n), :] - mean_ref[...]
        if n_pad != n_valid:
            d = d * _valid_mask()
        istd_ref[...] += jnp.sum(d * d, axis=0, keepdims=True)

        @pl.when(t == n_tiles - 1)
        def _():
            var = istd_ref[...] * (1.0 / n_valid)     # biased batch variance
            istd_ref[...] = jax.lax.rsqrt(var + BN_EPS)

    # -- phase 2: normalize, gamma/beta, LeakyReLU, fc2 reduce, tanh, store ---
    @pl.when(p == 2)
    def _phase2():
        hn = (h3_ref[pl.ds(row0, tile_n), :] - mean_ref[...]) * istd_ref[...]
        hn = _leaky(hn * g_ref[...] + be_ref[...])
        # fc2 (64 -> 1): VPU broadcast-multiply + lane reduction (no 1-wide MXU)
        out = jnp.sum(hn * wf2_ref[...], axis=-1, keepdims=True) + bf2_ref[...]
        o_ref[...] = jnp.tanh(out)


# ---------------------------------------------------------------------------
# Fallback kernel (batch too large for the VMEM h3 cache): 2 phases, recompute
# the conv/fc1 path in phase 1, shifted-sum batch statistics.
# ---------------------------------------------------------------------------
def _recompute_kernel(x_ref, w1_ref, b1_ref, w2_ref, b2_ref,
                      wf1_ref, bf1_ref, g_ref, be_ref, wf2_ref, bf2_ref,
                      o_ref, sum_ref, ssq_ref, *, n_valid, tile_n, n_pad):
    p = pl.program_id(0)
    t = pl.program_id(1)
    n_tiles = pl.num_programs(1)

    h3 = _compute_h3(x_ref, w1_ref, b1_ref, w2_ref, b2_ref, wf1_ref, bf1_ref)

    @pl.when(p == 0)
    def _phase0():
        @pl.when(t == 0)
        def _():
            sum_ref[...] = jnp.zeros_like(sum_ref)
            ssq_ref[...] = jnp.zeros_like(ssq_ref)
            o_ref[...] = jnp.zeros_like(o_ref)       # defensive resident init

        if n_pad != n_valid:                         # static: padding exists
            rows = (t * tile_n
                    + jax.lax.broadcasted_iota(jnp.int32, (tile_n, 1), 0))
            hm = h3 * (rows < n_valid).astype(jnp.float32)
        else:
            hm = h3
        sum_ref[...] += jnp.sum(hm, axis=0, keepdims=True)
        ssq_ref[...] += jnp.sum(hm * h3, axis=0, keepdims=True)   # valid * h3^2

        @pl.when(t == n_tiles - 1)
        def _():
            inv_n = 1.0 / n_valid
            mean = sum_ref[...] * inv_n
            var = jnp.maximum(ssq_ref[...] * inv_n - mean * mean, 0.0)
            sum_ref[...] = mean                      # reuse scratch: mean
            ssq_ref[...] = jax.lax.rsqrt(var + BN_EPS)  # reuse scratch: 1/std

    @pl.when(p == 1)
    def _phase1():
        hn = (h3 - sum_ref[...]) * ssq_ref[...]
        hn = _leaky(hn * g_ref[...] + be_ref[...])
        out = jnp.sum(hn * wf2_ref[...], axis=-1, keepdims=True) + bf2_ref[...]
        o_ref[...] = jnp.tanh(out)


def cnn_policy_forward(x, params, *, tile_n=1024, use_bf16=False,
                       use_cache=None):
    """x: (N, 2, 6, 7) float32 -> (N, 1) float32 (training-mode BatchNorm)."""
    (c1_w, c1_b, c2_w, c2_b, f1_w, f1_b, bn_g, bn_b, f2_w, f2_b) = params
    N = x.shape[0]

    w1_big, b1_big, w2_big, b2_big = _fold_conv_weights(c1_w, c1_b, c2_w, c2_b)
    if use_bf16:
        # bf16 MXU stream for the two big matmuls (f32 accumulation); loosens
        # numerics slightly, so off by default.
        w1_big = w1_big.astype(jnp.bfloat16)
        w2_big = w2_big.astype(jnp.bfloat16)

    # Row tile: multiple of 8, capped to the (rounded-up) batch.
    tile_n = max(8, min(_round_up(tile_n, 8), _round_up(N, 8)))
    n_pad = _round_up(N, tile_n)
    n_tiles = n_pad // tile_n

    x_flat = x.reshape(N, D_IN)                      # pure reshape, no transpose
    if n_pad != N:
        x_flat = jnp.pad(x_flat, ((0, n_pad - N), (0, 0)))

    # (n_pad, 64) f32 cache; the 64-lane dim pads to 128 in VMEM.
    cache_bytes = n_pad * 128 * 4
    if use_cache is None:
        use_cache = cache_bytes <= CACHE_BUDGET_BYTES

    wmap = lambda p, t: (0, 0)                       # weights resident in VMEM
    weight_specs = [
        pl.BlockSpec((D_IN, D_H1), wmap),    # W1_big
        pl.BlockSpec((1, D_H1), wmap),       # b1 (pos-tiled)
        pl.BlockSpec((D_H1, D_H2), wmap),    # W2_big
        pl.BlockSpec((1, D_H2), wmap),       # b2 (channel-tiled)
        pl.BlockSpec((D_H2, D_FC), wmap),    # fc1 weight (48, 64)
        pl.BlockSpec((1, D_FC), wmap),       # fc1 bias
        pl.BlockSpec((1, D_FC), wmap),       # bn gamma
        pl.BlockSpec((1, D_FC), wmap),       # bn beta
        pl.BlockSpec((1, D_FC), wmap),       # fc2 weight row
        pl.BlockSpec((1, 1), wmap),          # fc2 bias
    ]
    weight_args = (w1_big, b1_big, w2_big, b2_big,
                   f1_w.T, f1_b.reshape(1, D_FC),
                   bn_g.reshape(1, D_FC), bn_b.reshape(1, D_FC),
                   f2_w.reshape(1, D_FC), f2_b.reshape(1, 1))

    static = dict(n_valid=N, tile_n=tile_n, n_pad=n_pad)
    if use_cache:
        kernel = functools.partial(_cached_kernel, **static)
        grid = (3, n_tiles)                          # (phase, batch tile)
        # Phase 0 streams x once; phases 1/2 pin the already-resident last
        # block so x is never re-fetched from HBM.
        x_spec = pl.BlockSpec(
            (tile_n, D_IN), lambda p, t: (jnp.where(p == 0, t, n_tiles - 1), 0))
        # Output block is written only in phase 2; block 0 stays resident
        # through phases 0/1 and is flushed exactly once with real data.
        out_spec = pl.BlockSpec(
            (tile_n, 1), lambda p, t: (jnp.where(p == 2, t, 0), 0))
        scratch = [pltpu.VMEM((1, D_FC), jnp.float32),    # sum -> mean
                   pltpu.VMEM((1, D_FC), jnp.float32),    # ssq -> 1/std
                   pltpu.VMEM((n_pad, D_FC), jnp.float32)]  # h3 cache
        vmem_limit = min(48 * 1024 * 1024, 32 * 1024 * 1024 + cache_bytes)
    else:
        kernel = functools.partial(_recompute_kernel, **static)
        grid = (2, n_tiles)                          # (phase, batch tile)
        x_spec = pl.BlockSpec((tile_n, D_IN), lambda p, t: (t, 0))
        out_spec = pl.BlockSpec((tile_n, 1), lambda p, t: (p * t, 0))
        scratch = [pltpu.VMEM((1, D_FC), jnp.float32),
                   pltpu.VMEM((1, D_FC), jnp.float32)]
        vmem_limit = 32 * 1024 * 1024

    out = pl.pallas_call(
        kernel,
        out_shape=jax.ShapeDtypeStruct((n_pad, 1), jnp.float32),
        grid_spec=pltpu.PrefetchScalarGridSpec(
            num_scalar_prefetch=0,
            grid=grid,
            in_specs=[x_spec] + weight_specs,
            out_specs=out_spec,
            scratch_shapes=scratch,
        ),
        compiler_params=pltpu.CompilerParams(
            # Training-mode BN couples all rows (cross-tile accumulation and
            # phase->phase dependencies), so both axes must be sequential.
            dimension_semantics=("arbitrary", "arbitrary"),
            vmem_limit_bytes=vmem_limit),
    )(x_flat, *weight_args)

    return out[:N]


# ---------------------------------------------------------------------------
# Pure-JAX reference (for correctness check)
# ---------------------------------------------------------------------------
def reference_forward(x, params):
    (c1_w, c1_b, c2_w, c2_b, f1_w, f1_b, bn_g, bn_b, f2_w, f2_b) = params
    dn = ("NCHW", "OIHW", "NCHW")
    y = jax.lax.conv_general_dilated(x, c1_w, (1, 1), "VALID",
                                     dimension_numbers=dn)
    y = _leaky(y + c1_b[None, :, None, None])
    y = jax.lax.conv_general_dilated(y, c2_w, (1, 1), "VALID",
                                     dimension_numbers=dn)
    y = _leaky(y + c2_b[None, :, None, None])
    y = y.reshape(y.shape[0], -1)                    # (N, 48), torch view order
    h = y @ f1_w.T + f1_b
    mean = jnp.mean(h, axis=0, keepdims=True)
    var = jnp.mean((h - mean) ** 2, axis=0, keepdims=True)
    h = (h - mean) * jax.lax.rsqrt(var + BN_EPS)
    h = _leaky(h * bn_g + bn_b)
    return jnp.tanh(h @ f2_w.T + f2_b)


def init_params(key):
    ks = jax.random.split(key, 8)
    u = lambda k, shape, s: jax.random.uniform(k, shape, jnp.float32, -s, s)
    c1_w = u(ks[0], (32, 2, 4, 4), 0.43)   # ~kaiming_uniform bound for fan_in=32
    c1_b = u(ks[1], (32,), 0.17)
    c2_w = u(ks[2], (4, 32, 1, 1), 0.43)
    c2_b = u(ks[3], (4,), 0.17)
    f1_w = u(ks[4], (64, 48), 0.35)
    f1_b = u(ks[5], (64,), 0.14)
    bn_g = jnp.ones((64,), jnp.float32)    # BatchNorm1d default init
    bn_b = jnp.zeros((64,), jnp.float32)
    f2_w = u(ks[6], (1, 64), 0.30)
    f2_b = u(ks[7], (1,), 0.12)
    return (c1_w, c1_b, c2_w, c2_b, f1_w, f1_b, bn_g, bn_b, f2_w, f2_b)


if __name__ == "__main__":
    key = jax.random.PRNGKey(0)
    k_x, k_p = jax.random.split(key)
    # N deliberately not a multiple of the row tile: exercises padding, the
    # in-kernel BN masking, and (with tile_n=8) the multi-tile phased paths.
    N = 21
    x = jax.random.normal(k_x, (N, 2, 6, 7), dtype=jnp.float32)
    params = init_params(k_p)

    ref = jax.block_until_ready(reference_forward(x, params))

    # 1) cached 3-phase path: multi-tile + padded rows (tile_n=8 -> 3 tiles).
    out_c = jax.block_until_ready(
        jax.jit(lambda a, p: cnn_policy_forward(a, p, tile_n=8,
                                                use_cache=True))(x, params))
    # 2) forced recompute fallback (large-batch / small-VMEM regime).
    out_r = jax.block_until_ready(
        jax.jit(lambda a, p: cnn_policy_forward(a, p, tile_n=8,
                                                use_cache=False))(x, params))
    # 3) default config (auto cache selection, fat tile capped to the batch).
    out_d = jax.block_until_ready(
        jax.jit(lambda a, p: cnn_policy_forward(a, p))(x, params))

    for name, out in (("cached", out_c), ("recompute", out_r),
                      ("default", out_d)):
        assert out.shape == (N, 1), (name, out.shape)
        err = float(jnp.max(jnp.abs(out - ref)))
        assert err < 1e-4, f"{name}: mismatch vs reference: {err}"
    print("KERNEL_OK")
</pallas_src>

<mosaic_0001>
module attributes {stable_mosaic.version = 11 : i64} {
  func.func @_cached_kernel(%arg0: i32, %arg1: i32, %arg2: memref<8x84xf32, #tpu.memory_space<vmem>>, %arg3: memref<84x384xf32, #tpu.memory_space<vmem>>, %arg4: memref<1x384xf32, #tpu.memory_space<vmem>>, %arg5: memref<384x48xf32, #tpu.memory_space<vmem>>, %arg6: memref<1x48xf32, #tpu.memory_space<vmem>>, %arg7: memref<48x64xf32, #tpu.memory_space<vmem>>, %arg8: memref<1x64xf32, #tpu.memory_space<vmem>>, %arg9: memref<1x64xf32, #tpu.memory_space<vmem>>, %arg10: memref<1x64xf32, #tpu.memory_space<vmem>>, %arg11: memref<1x64xf32, #tpu.memory_space<vmem>>, %arg12: memref<1x1xf32, #tpu.memory_space<vmem>>, %arg13: memref<8x1xf32, #tpu.memory_space<vmem>>, %arg14: memref<1x64xf32, #tpu.memory_space<vmem>>, %arg15: memref<1x64xf32, #tpu.memory_space<vmem>>, %arg16: memref<24x64xf32, #tpu.memory_space<vmem>>) attributes {dimension_semantics = [#tpu.dimension_semantics<arbitrary>, #tpu.dimension_semantics<arbitrary>], iteration_bounds = array<i64: 3, 3>, scalar_prefetch = 0 : i64, scratch_operands = 3 : i64, tpu.core_type = #tpu.core_type<tc>, window_params = [{transform_indices = @transform_0, window_bounds = array<i64: 8, 84>}, {pipeline_mode = #tpu.pipeline_mode<synchronous>, transform_indices = @transform_1, window_bounds = array<i64: 84, 384>}, {pipeline_mode = #tpu.pipeline_mode<synchronous>, transform_indices = @transform_2, window_bounds = array<i64: 1, 384>}, {pipeline_mode = #tpu.pipeline_mode<synchronous>, transform_indices = @transform_3, window_bounds = array<i64: 384, 48>}, {pipeline_mode = #tpu.pipeline_mode<synchronous>, transform_indices = @transform_4, window_bounds = array<i64: 1, 48>}, {pipeline_mode = #tpu.pipeline_mode<synchronous>, transform_indices = @transform_5, window_bounds = array<i64: 48, 64>}, {pipeline_mode = #tpu.pipeline_mode<synchronous>, transform_indices = @transform_6, window_bounds = array<i64: 1, 64>}, {pipeline_mode = #tpu.pipeline_mode<synchronous>, transform_indices = @transform_7, window_bounds = array<i64: 1, 64>}, {pipeline_mode = #tpu.pipeline_mode<synchronous>, transform_indices = @transform_8, window_bounds = array<i64: 1, 64>}, {pipeline_mode = #tpu.pipeline_mode<synchronous>, transform_indices = @transform_9, window_bounds = array<i64: 1, 64>}, {pipeline_mode = #tpu.pipeline_mode<synchronous>, transform_indices = @transform_10, window_bounds = array<i64: 1, 1>}, {transform_indices = @transform_11, window_bounds = array<i64: 8, 1>}]} {
    %c8_i32 = arith.constant 8 : i32
    %0 = arith.muli %arg1, %c8_i32 : i32
    %1 = tpu.assume_multiple %0, 8 : i32
    %c0_i32 = arith.constant 0 : i32
    %2 = arith.cmpi eq, %arg0, %c0_i32 : i32
    %3 = arith.extui %2 : i1 to i32
    %c0_i32_0 = arith.constant 0 : i32
    %4 = arith.cmpi ne, %3, %c0_i32_0 : i32
    scf.if %4 {
      %c0_i32_3 = arith.constant 0 : i32
      %11 = arith.cmpi eq, %arg1, %c0_i32_3 : i32
      %12 = arith.extui %11 : i1 to i32
      %c0_i32_4 = arith.constant 0 : i32
      %13 = arith.cmpi ne, %12, %c0_i32_4 : i32
      scf.if %13 {
        %cst_32 = arith.constant 0.000000e+00 : f32
        %59 = vector.broadcast %cst_32 : f32 to vector<1x64xf32>
        %c0_33 = arith.constant 0 : index
        %c0_34 = arith.constant 0 : index
        %60 = vector.load %arg14[%c0_33, %c0_34] : memref<1x64xf32, #tpu.memory_space<vmem>>, vector<1x64xf32>
        tpu.vector_store %arg14[%c0_33, %c0_34], %59 {strides = array<i32>} : memref<1x64xf32, #tpu.memory_space<vmem>>, vector<1x64xf32>,
        %cst_35 = arith.constant 0.000000e+00 : f32
        %61 = vector.broadcast %cst_35 : f32 to vector<1x64xf32>
        %c0_36 = arith.constant 0 : index
        %c0_37 = arith.constant 0 : index
        %62 = vector.load %arg15[%c0_36, %c0_37] : memref<1x64xf32, #tpu.memory_space<vmem>>, vector<1x64xf32>
        tpu.vector_store %arg15[%c0_36, %c0_37], %61 {strides = array<i32>} : memref<1x64xf32, #tpu.memory_space<vmem>>, vector<1x64xf32>,
        %cst_38 = arith.constant 0.000000e+00 : f32
        %63 = vector.broadcast %cst_38 : f32 to vector<8x1xf32>
        %c0_39 = arith.constant 0 : index
        %c0_40 = arith.constant 0 : index
        %64 = vector.load %arg13[%c0_39, %c0_40] : memref<8x1xf32, #tpu.memory_space<vmem>>, vector<8x1xf32>
        tpu.vector_store %arg13[%c0_39, %c0_40], %63 {strides = array<i32>} : memref<8x1xf32, #tpu.memory_space<vmem>>, vector<8x1xf32>,
      } else {
      }
      %c0 = arith.constant 0 : index
      %c0_5 = arith.constant 0 : index
      %14 = vector.load %arg2[%c0, %c0_5] : memref<8x84xf32, #tpu.memory_space<vmem>>, vector<8x84xf32>
      %c0_6 = arith.constant 0 : index
      %c0_7 = arith.constant 0 : index
      %15 = vector.load %arg3[%c0_6, %c0_7] : memref<84x384xf32, #tpu.memory_space<vmem>>, vector<84x384xf32>
      %cst = arith.constant dense<0.000000e+00> : vector<8x384xf32>
      %16 = tpu.matmul %14, %15, %cst {dimension_numbers = #tpu.dot_dimension_numbers<[1], [0], [0], [1], [0, 0, 1, 1], [], []>} : vector<8x84xf32>, vector<84x384xf32>, vector<8x384xf32> -> vector<8x384xf32>
      %c0_8 = arith.constant 0 : index
      %c0_9 = arith.constant 0 : index
      %17 = vector.load %arg4[%c0_8, %c0_9] : memref<1x384xf32, #tpu.memory_space<vmem>>, vector<1x384xf32>
      %18 = vector.broadcast %17 : vector<1x384xf32> to vector<8x384xf32>
      %19 = arith.addf %16, %18 : vector<8x384xf32>
      %cst_10 = arith.constant 0.000000e+00 : f32
      %20 = vector.broadcast %cst_10 : f32 to vector<8x384xf32>
      %21 = arith.cmpf ogt, %19, %20 : vector<8x384xf32>
      %cst_11 = arith.constant 0.00999999977 : f32
      %22 = vector.broadcast %cst_11 : f32 to vector<8x384xf32>
      %23 = arith.mulf %22, %19 : vector<8x384xf32>
      %24 = arith.select %21, %19, %23 : vector<8x384xi1>, vector<8x384xf32>
      %c0_12 = arith.constant 0 : index
      %c0_13 = arith.constant 0 : index
      %25 = vector.load %arg5[%c0_12, %c0_13] : memref<384x48xf32, #tpu.memory_space<vmem>>, vector<384x48xf32>
      %cst_14 = arith.constant dense<0.000000e+00> : vector<8x48xf32>
      %26 = tpu.matmul %24, %25, %cst_14 {dimension_numbers = #tpu.dot_dimension_numbers<[1], [0], [0], [1], [0, 0, 1, 1], [], []>} : vector<8x384xf32>, vector<384x48xf32>, vector<8x48xf32> -> vector<8x48xf32>
      %c0_15 = arith.constant 0 : index
      %c0_16 = arith.constant 0 : index
      %27 = vector.load %arg6[%c0_15, %c0_16] : memref<1x48xf32, #tpu.memory_space<vmem>>, vector<1x48xf32>
      %28 = vector.broadcast %27 : vector<1x48xf32> to vector<8x48xf32>
      %29 = arith.addf %26, %28 : vector<8x48xf32>
      %cst_17 = arith.constant 0.000000e+00 : f32
      %30 = vector.broadcast %cst_17 : f32 to vector<8x48xf32>
      %31 = arith.cmpf ogt, %29, %30 : vector<8x48xf32>
      %cst_18 = arith.constant 0.00999999977 : f32
      %32 = vector.broadcast %cst_18 : f32 to vector<8x48xf32>
      %33 = arith.mulf %32, %29 : vector<8x48xf32>
      %34 = arith.select %31, %29, %33 : vector<8x48xi1>, vector<8x48xf32>
      %c0_19 = arith.constant 0 : index
      %c0_20 = arith.constant 0 : index
      %35 = vector.load %arg7[%c0_19, %c0_20] : memref<48x64xf32, #tpu.memory_space<vmem>>, vector<48x64xf32>
      %cst_21 = arith.constant dense<0.000000e+00> : vector<8x64xf32>
      %36 = tpu.matmul %34, %35, %cst_21 {dimension_numbers = #tpu.dot_dimension_numbers<[1], [0], [0], [1], [0, 0, 1, 1], [], []>} : vector<8x48xf32>, vector<48x64xf32>, vector<8x64xf32> -> vector<8x64xf32>
      %c0_22 = arith.constant 0 : index
      %c0_23 = arith.constant 0 : index
      %37 = vector.load %arg8[%c0_22, %c0_23] : memref<1x64xf32, #tpu.memory_space<vmem>>, vector<1x64xf32>
      %38 = vector.broadcast %37 : vector<1x64xf32> to vector<8x64xf32>
      %39 = arith.addf %36, %38 : vector<8x64xf32>
      %40 = arith.index_cast %1 : i32 to index
      %c0_24 = arith.constant 0 : index
      %41 = vector.load %arg16[%40, %c0_24] : memref<24x64xf32, #tpu.memory_space<vmem>>, vector<8x64xf32>
      tpu.vector_store %arg16[%40, %c0_24], %39 {strides = array<i32>} : memref<24x64xf32, #tpu.memory_space<vmem>>, vector<8x64xf32>,
      %42 = tpu.iota {dimensions = array<i32: 0>} : vector<8x1xi32>
      %43 = vector.broadcast %1 : i32 to vector<8x1xi32>
      %44 = arith.addi %43, %42 : vector<8x1xi32>
      %c21_i32 = arith.constant 21 : i32
      %45 = vector.broadcast %c21_i32 : i32 to vector<8x1xi32>
      %46 = arith.cmpi slt, %44, %45 : vector<8x1xi32>
      %47 = arith.extui %46 : vector<8x1xi1> to vector<8x1xi32>
      %48 = arith.sitofp %47 : vector<8x1xi32> to vector<8x1xf32>
      %49 = vector.broadcast %48 : vector<8x1xf32> to vector<8x64xf32>
      %50 = arith.mulf %39, %49 : vector<8x64xf32>
      %c0_25 = arith.constant 0 : index
      %c0_26 = arith.constant 0 : index
      %51 = vector.load %arg14[%c0_25, %c0_26] : memref<1x64xf32, #tpu.memory_space<vmem>>, vector<1x64xf32>
      %cst_27 = arith.constant dense<0.000000e+00> : vector<64xf32>
      %52 = vector.multi_reduction <add>, %50, %cst_27 [0] : vector<8x64xf32> to vector<64xf32>
      %53 = vector.shape_cast %52 : vector<64xf32> to vector<1x64xf32>
      %54 = arith.addf %51, %53 : vector<1x64xf32>
      %c0_28 = arith.constant 0 : index
      %c0_29 = arith.constant 0 : index
      %55 = vector.load %arg14[%c0_28, %c0_29] : memref<1x64xf32, #tpu.memory_space<vmem>>, vector<1x64xf32>
      tpu.vector_store %arg14[%c0_28, %c0_29], %54 {strides = array<i32>} : memref<1x64xf32, #tpu.memory_space<vmem>>, vector<1x64xf32>,
      %c2_i32_30 = arith.constant 2 : i32
      %56 = arith.cmpi eq, %arg1, %c2_i32_30 : i32
      %57 = arith.extui %56 : i1 to i32
      %c0_i32_31 = arith.constant 0 : i32
      %58 = arith.cmpi ne, %57, %c0_i32_31 : i32
      scf.if %58 {
        %c0_32 = arith.constant 0 : index
        %c0_33 = arith.constant 0 : index
        %59 = vector.load %arg14[%c0_32, %c0_33] : memref<1x64xf32, #tpu.memory_space<vmem>>, vector<1x64xf32>
        %cst_34 = arith.constant 0.0476190485 : f32
        %60 = vector.broadcast %cst_34 : f32 to vector<1x64xf32>
        %61 = arith.mulf %59, %60 : vector<1x64xf32>
        %c0_35 = arith.constant 0 : index
        %c0_36 = arith.constant 0 : index
        %62 = vector.load %arg14[%c0_35, %c0_36] : memref<1x64xf32, #tpu.memory_space<vmem>>, vector<1x64xf32>
        tpu.vector_store %arg14[%c0_35, %c0_36], %61 {strides = array<i32>} : memref<1x64xf32, #tpu.memory_space<vmem>>, vector<1x64xf32>,
      } else {
      }
    } else {
    }
    %c1_i32 = arith.constant 1 : i32
    %5 = arith.cmpi eq, %arg0, %c1_i32 : i32
    %6 = arith.extui %5 : i1 to i32
    %c0_i32_1 = arith.constant 0 : i32
    %7 = arith.cmpi ne, %6, %c0_i32_1 : i32
    scf.if %7 {
      %11 = arith.index_cast %1 : i32 to index
      %c0 = arith.constant 0 : index
      %12 = vector.load %arg16[%11, %c0] : memref<24x64xf32, #tpu.memory_space<vmem>>, vector<8x64xf32>
      %c0_3 = arith.constant 0 : index
      %c0_4 = arith.constant 0 : index
      %13 = vector.load %arg14[%c0_3, %c0_4] : memref<1x64xf32, #tpu.memory_space<vmem>>, vector<1x64xf32>
      %14 = vector.broadcast %13 : vector<1x64xf32> to vector<8x64xf32>
      %15 = arith.subf %12, %14 : vector<8x64xf32>
      %16 = tpu.iota {dimensions = array<i32: 0>} : vector<8x1xi32>
      %17 = vector.broadcast %1 : i32 to vector<8x1xi32>
      %18 = arith.addi %17, %16 : vector<8x1xi32>
      %c21_i32 = arith.constant 21 : i32
      %19 = vector.broadcast %c21_i32 : i32 to vector<8x1xi32>
      %20 = arith.cmpi slt, %18, %19 : vector<8x1xi32>
      %21 = arith.extui %20 : vector<8x1xi1> to vector<8x1xi32>
      %22 = arith.sitofp %21 : vector<8x1xi32> to vector<8x1xf32>
      %23 = vector.broadcast %22 : vector<8x1xf32> to vector<8x64xf32>
      %24 = arith.mulf %15, %23 : vector<8x64xf32>
      %c0_5 = arith.constant 0 : index
      %c0_6 = arith.constant 0 : index
      %25 = vector.load %arg15[%c0_5, %c0_6] : memref<1x64xf32, #tpu.memory_space<vmem>>, vector<1x64xf32>
      %26 = arith.mulf %24, %24 : vector<8x64xf32>
      %cst = arith.constant dense<0.000000e+00> : vector<64xf32>
      %27 = vector.multi_reduction <add>, %26, %cst [0] : vector<8x64xf32> to vector<64xf32>
      %28 = vector.shape_cast %27 : vector<64xf32> to vector<1x64xf32>
      %29 = arith.addf %25, %28 : vector<1x64xf32>
      %c0_7 = arith.constant 0 : index
      %c0_8 = arith.constant 0 : index
      %30 = vector.load %arg15[%c0_7, %c0_8] : memref<1x64xf32, #tpu.memory_space<vmem>>, vector<1x64xf32>
      tpu.vector_store %arg15[%c0_7, %c0_8], %29 {strides = array<i32>} : memref<1x64xf32, #tpu.memory_space<vmem>>, vector<1x64xf32>,
      %c2_i32_9 = arith.constant 2 : i32
      %31 = arith.cmpi eq, %arg1, %c2_i32_9 : i32
      %32 = arith.extui %31 : i1 to i32
      %c0_i32_10 = arith.constant 0 : i32
      %33 = arith.cmpi ne, %32, %c0_i32_10 : i32
      scf.if %33 {
        %c0_11 = arith.constant 0 : index
        %c0_12 = arith.constant 0 : index
        %34 = vector.load %arg15[%c0_11, %c0_12] : memref<1x64xf32, #tpu.memory_space<vmem>>, vector<1x64xf32>
        %cst_13 = arith.constant 0.0476190485 : f32
        %35 = vector.broadcast %cst_13 : f32 to vector<1x64xf32>
        %36 = arith.mulf %34, %35 : vector<1x64xf32>
        %cst_14 = arith.constant 9.99999974E-6 : f32
        %37 = vector.broadcast %cst_14 : f32 to vector<1x64xf32>
        %38 = arith.addf %36, %37 : vector<1x64xf32>
        %39 = math.rsqrt %38 : vector<1x64xf32>
        %c0_15 = arith.constant 0 : index
        %c0_16 = arith.constant 0 : index
        %40 = vector.load %arg15[%c0_15, %c0_16] : memref<1x64xf32, #tpu.memory_space<vmem>>, vector<1x64xf32>
        tpu.vector_store %arg15[%c0_15, %c0_16], %39 {strides = array<i32>} : memref<1x64xf32, #tpu.memory_space<vmem>>, vector<1x64xf32>,
      } else {
      }
    } else {
    }
    %c2_i32 = arith.constant 2 : i32
    %8 = arith.cmpi eq, %arg0, %c2_i32 : i32
    %9 = arith.extui %8 : i1 to i32
    %c0_i32_2 = arith.constant 0 : i32
    %10 = arith.cmpi ne, %9, %c0_i32_2 : i32
    scf.if %10 {
      %11 = arith.index_cast %1 : i32 to index
      %c0 = arith.constant 0 : index
      %12 = vector.load %arg16[%11, %c0] : memref<24x64xf32, #tpu.memory_space<vmem>>, vector<8x64xf32>
      %c0_3 = arith.constant 0 : index
      %c0_4 = arith.constant 0 : index
      %13 = vector.load %arg14[%c0_3, %c0_4] : memref<1x64xf32, #tpu.memory_space<vmem>>, vector<1x64xf32>
      %14 = vector.broadcast %13 : vector<1x64xf32> to vector<8x64xf32>
      %15 = arith.subf %12, %14 : vector<8x64xf32>
      %c0_5 = arith.constant 0 : index
      %c0_6 = arith.constant 0 : index
      %16 = vector.load %arg15[%c0_5, %c0_6] : memref<1x64xf32, #tpu.memory_space<vmem>>, vector<1x64xf32>
      %17 = vector.broadcast %16 : vector<1x64xf32> to vector<8x64xf32>
      %18 = arith.mulf %15, %17 : vector<8x64xf32>
      %c0_7 = arith.constant 0 : index
      %c0_8 = arith.constant 0 : index
      %19 = vector.load %arg9[%c0_7, %c0_8] : memref<1x64xf32, #tpu.memory_space<vmem>>, vector<1x64xf32>
      %20 = vector.broadcast %19 : vector<1x64xf32> to vector<8x64xf32>
      %21 = arith.mulf %18, %20 : vector<8x64xf32>
      %c0_9 = arith.constant 0 : index
      %c0_10 = arith.constant 0 : index
      %22 = vector.load %arg10[%c0_9, %c0_10] : memref<1x64xf32, #tpu.memory_space<vmem>>, vector<1x64xf32>
      %23 = vector.broadcast %22 : vector<1x64xf32> to vector<8x64xf32>
      %24 = arith.addf %21, %23 : vector<8x64xf32>
      %cst = arith.constant 0.000000e+00 : f32
      %25 = vector.broadcast %cst : f32 to vector<8x64xf32>
      %26 = arith.cmpf ogt, %24, %25 : vector<8x64xf32>
      %cst_11 = arith.constant 0.00999999977 : f32
      %27 = vector.broadcast %cst_11 : f32 to vector<8x64xf32>
      %28 = arith.mulf %27, %24 : vector<8x64xf32>
      %29 = arith.select %26, %24, %28 : vector<8x64xi1>, vector<8x64xf32>
      %c0_12 = arith.constant 0 : index
      %c0_13 = arith.constant 0 : index
      %30 = vector.load %arg11[%c0_12, %c0_13] : memref<1x64xf32, #tpu.memory_space<vmem>>, vector<1x64xf32>
      %31 = vector.broadcast %30 : vector<1x64xf32> to vector<8x64xf32>
      %32 = arith.mulf %29, %31 : vector<8x64xf32>
      %cst_14 = arith.constant dense<0.000000e+00> : vector<8xf32>
      %33 = vector.multi_reduction <add>, %32, %cst_14 [1] : vector<8x64xf32> to vector<8xf32>
      %34 = vector.shape_cast %33 : vector<8xf32> to vector<8x1xf32>
      %c0_15 = arith.constant 0 : index
      %c0_16 = arith.constant 0 : index
      %35 = vector.load %arg12[%c0_15, %c0_16] : memref<1x1xf32, #tpu.memory_space<vmem>>, vector<1x1xf32>
      %36 = vector.broadcast %35 : vector<1x1xf32> to vector<8x1xf32>
      %37 = arith.addf %34, %36 : vector<8x1xf32>
      %38 = math.tanh %37 : vector<8x1xf32>
      %c0_17 = arith.constant 0 : index
      %c0_18 = arith.constant 0 : index
      %39 = vector.load %arg13[%c0_17, %c0_18] : memref<8x1xf32, #tpu.memory_space<vmem>>, vector<8x1xf32>
      tpu.vector_store %arg13[%c0_17, %c0_18], %38 {strides = array<i32>} : memref<8x1xf32, #tpu.memory_space<vmem>>, vector<8x1xf32>,
    } else {
    }
    return
  }
  func.func @transform_0(%arg0: i32, %arg1: i32) -> (i32, i32) {
    %c0_i32 = arith.constant 0 : i32
    %0 = arith.cmpi eq, %arg0, %c0_i32 : i32
    %c2_i32 = arith.constant 2 : i32
    %1 = arith.select %0, %arg1, %c2_i32 : i32
    %c0_i32_0 = arith.constant 0 : i32
    %c0_i32_1 = arith.constant 0 : i32
    return %1, %c0_i32_0 : i32, i32
  }
  func.func @transform_1(%arg0: i32, %arg1: i32) -> (i32, i32) {
    %c0_i32 = arith.constant 0 : i32
    %c0_i32_0 = arith.constant 0 : i32
    %c0_i32_1 = arith.constant 0 : i32
    return %c0_i32, %c0_i32_0 : i32, i32
  }
  func.func @transform_2(%arg0: i32, %arg1: i32) -> (i32, i32) {
    %c0_i32 = arith.constant 0 : i32
    %c0_i32_0 = arith.constant 0 : i32
    %c0_i32_1 = arith.constant 0 : i32
    return %c0_i32, %c0_i32_0 : i32, i32
  }
  func.func @transform_3(%arg0: i32, %arg1: i32) -> (i32, i32) {
    %c0_i32 = arith.constant 0 : i32
    %c0_i32_0 = arith.constant 0 : i32
    %c0_i32_1 = arith.constant 0 : i32
    return %c0_i32, %c0_i32_0 : i32, i32
  }
  func.func @transform_4(%arg0: i32, %arg1: i32) -> (i32, i32) {
    %c0_i32 = arith.constant 0 : i32
    %c0_i32_0 = arith.constant 0 : i32
    %c0_i32_1 = arith.constant 0 : i32
    return %c0_i32, %c0_i32_0 : i32, i32
  }
  func.func @transform_5(%arg0: i32, %arg1: i32) -> (i32, i32) {
    %c0_i32 = arith.constant 0 : i32
    %c0_i32_0 = arith.constant 0 : i32
    %c0_i32_1 = arith.constant 0 : i32
    return %c0_i32, %c0_i32_0 : i32, i32
  }
  func.func @transform_6(%arg0: i32, %arg1: i32) -> (i32, i32) {
    %c0_i32 = arith.constant 0 : i32
    %c0_i32_0 = arith.constant 0 : i32
    %c0_i32_1 = arith.constant 0 : i32
    return %c0_i32, %c0_i32_0 : i32, i32
  }
  func.func @transform_7(%arg0: i32, %arg1: i32) -> (i32, i32) {
    %c0_i32 = arith.constant 0 : i32
    %c0_i32_0 = arith.constant 0 : i32
    %c0_i32_1 = arith.constant 0 : i32
    return %c0_i32, %c0_i32_0 : i32, i32
  }
  func.func @transform_8(%arg0: i32, %arg1: i32) -> (i32, i32) {
    %c0_i32 = arith.constant 0 : i32
    %c0_i32_0 = arith.constant 0 : i32
    %c0_i32_1 = arith.constant 0 : i32
    return %c0_i32, %c0_i32_0 : i32, i32
  }
  func.func @transform_9(%arg0: i32, %arg1: i32) -> (i32, i32) {
    %c0_i32 = arith.constant 0 : i32
    %c0_i32_0 = arith.constant 0 : i32
    %c0_i32_1 = arith.constant 0 : i32
    return %c0_i32, %c0_i32_0 : i32, i32
  }
  func.func @transform_10(%arg0: i32, %arg1: i32) -> (i32, i32) {
    %c0_i32 = arith.constant 0 : i32
    %c0_i32_0 = arith.constant 0 : i32
    %c0_i32_1 = arith.constant 0 : i32
    return %c0_i32, %c0_i32_0 : i32, i32
  }
  func.func @transform_11(%arg0: i32, %arg1: i32) -> (i32, i32) {
    %c2_i32 = arith.constant 2 : i32
    %0 = arith.cmpi eq, %arg0, %c2_i32 : i32
    %c0_i32 = arith.constant 0 : i32
    %1 = arith.select %0, %arg1, %c0_i32 : i32
    %c0_i32_0 = arith.constant 0 : i32
    %c0_i32_1 = arith.constant 0 : i32
    return %1, %c0_i32_0 : i32, i32
  }
}

</mosaic_0001>

<llo_original>
// kernel: tile.8
$region0: #{tile.8}
  #allocation0 [shape = 's32[1]{0}', space=sflag, size = 0x4, scoped, tag = 'scoped memory for tile.8']
  %s0 = inlined_call_operand.vmem [shape: f32[32], index: 0, kind: input, shape index: {}]
  %s1 = inlined_call_operand.vmem [shape: f32[12,32], index: 1, kind: output, shape index: {}]
  // Predicated region
  $region2: #{tile.8} parent=0 // pred_check
    _
  $region3: #{tile.8} parent=0 // pred_check_branch
    %3 = sbr.rel (0) target = $region5
  $region4: #{tile.8} parent=0 // pred_region
    _
  $region5: #{tile.8} parent=0 // pred_fallthru
    _
  %v4 = vld [vmem:[%s0] ss:$0 sm:$0xff]
  %5 = vst [vmem:[%s1] sm:$0xff] %v4
  %s6 = scalar_lea.vmem %s1, 8
  %7 = vst [vmem:[%s6] sm:$0xff] %v4

// kernel: tile.9
$region0: #{tile.9}
  %s0 = inlined_call_operand.vmem [shape: f32[12,32], index: 0, kind: input, shape index: {}]
  %s1 = inlined_call_operand.vmem [shape: f32[1,384], index: 1, kind: output, shape index: {}]
  $region1: #{tile.9} parent=0
    #allocation0 [shape = 'u8[12288]{0}', space=vmem, size = 0x3000, scoped, tag = 'scoped mem for output reshape']
    %v2 = vld [vmem:[%s0] ss:$4 sm:$0x7]
    %vm3 = vcmask 261120
    %4 = vst.msk [vmem:[#allocation0] ss:$8 sm:$0x7] %vm3, %v2
    %s5 = scalar_lea.vmem %s0, 3
    %v6 = vld [vmem:[%s5] ss:$4 sm:$0x7]
    %7 = vrot.lane.b32.xlu0 %v6, 96
    %v8 = vpop.permute.xlu0 %7
    %vm9 = vcmask 1048320
    %10 = vst.msk [vmem:[#allocation0] ss:$8 sm:$0x7] %vm9, %v8
    %s11 = scalar_lea.vmem %s0, 2
    %v12 = vld [vmem:[%s11] ss:$4 sm:$0x7]
    %13 = vrot.lane.b32.xlu0 %v12, 64
    %v14 = vpop.permute.xlu0 %13
    %vm15 = vcmask 785920
    %16 = vst.msk [vmem:[#allocation0] ss:$8 sm:$0x7] %vm15, %v14
    %s17 = scalar_lea.vmem %s0, 1
    %v18 = vld [vmem:[%s17] ss:$4 sm:$0x7]
    %19 = vrot.lane.b32.xlu0 %v18, 32
    %v20 = vpop.permute.xlu0 %19
    %vm21 = vcmask 523520
    %22 = vst.msk [vmem:[#allocation0] ss:$8 sm:$0x7] %vm21, %v20
    %s24 = sshllo.u32 0, 1
    %v26 = vld [vmem:[#allocation0] sm:%s24]
    %s27 = sshllo.u32 0, 1
    %28 = vst [vmem:[%s1] sm:%s27] %v26
    %s29 = scalar_lea.vmem [#allocation0], 8
    %v30 = vld [vmem:[%s29] sm:%s24]
    %s31 = sshllo.u32 0, 1
    %s32 = scalar_lea.vmem %s1, 1
    %33 = vst [vmem:[%s32] sm:%s31] %v30
    %s34 = scalar_lea.vmem [#allocation0], 16
    %v35 = vld [vmem:[%s34] sm:%s24]
    %s36 = sshllo.u32 0, 1
    %s37 = smul.addr 1, 2
    %s38 = scalar_lea.vmem %s1, %s37
    %39 = vst [vmem:[%s38] sm:%s36] %v35

// kernel: _lambda_.1
$region0: #{_lambda_.1}
  #allocation0 [shape = 'u32[]', space=smem, size = 0x4, offset = 0x4, fixed_abs, tag = 'smem constant byte address 0x4 - core index']
  #allocation1 [shape = 'u32[144,128]{1,0:T(1,128)}', space=vmem, size = 0x12000, scoped, tag = 'internal scratch']
  #allocation2 [shape = 'f32[1,64]{1,0:T(1,128)}', space=vmem, size = 0x200, scoped, tag = 'scratch operand']
  #allocation3 [shape = 'f32[1,64]{1,0:T(1,128)}', space=vmem, size = 0x200, scoped, tag = 'scratch operand']
  #allocation4 [shape = 'f32[24,64]{1,0:T(8,128)}', space=vmem, size = 0x3000, scoped, tag = 'scratch operand']
  #allocation5 [shape = 'f32[1,1]{1,0:T(1,128)S(1)}', space=vmem, size = 0x200, scoped, tag = 'scoped memory for _lambda_.1']
  %s0 = inlined_call_operand.vmem [shape: f32[24,84], index: 0, kind: input, shape index: {}]
  %s1 = inlined_call_operand.vmem [shape: f32[84,384], index: 1, kind: input, shape index: {}]
  %s2 = inlined_call_operand.vmem [shape: f32[1,384], index: 2, kind: input, shape index: {}]
  %s3 = inlined_call_operand.vmem [shape: f32[384,48], index: 3, kind: input, shape index: {}]
  %s4 = inlined_call_operand.vmem [shape: f32[1,48], index: 4, kind: input, shape index: {}]
  %s5 = inlined_call_operand.vmem [shape: f32[48,64], index: 5, kind: input, shape index: {}]
  %s6 = inlined_call_operand.vmem [shape: f32[1,64], index: 6, kind: input, shape index: {}]
  %s7 = inlined_call_operand.vmem [shape: f32[1,64], index: 7, kind: input, shape index: {}]
  %s8 = inlined_call_operand.vmem [shape: f32[1,64], index: 8, kind: input, shape index: {}]
  %s9 = inlined_call_operand.vmem [shape: f32[1,64], index: 9, kind: input, shape index: {}]
  %s10 = inlined_call_operand.<no memory space> [shape: f32[1,1], index: 10, kind: input, shape index: {}]
  %s11 = inlined_call_operand.vmem [shape: f32[24,1], index: 11, kind: output, shape index: {}]
  %s12 = sld [smem:[#allocation0]]
  $region101: #{_lambda_.1} parent=0
    _
  %s14 = ssub.s32 1, %s12
  %s15 = scalar_select 0, %s14, %s12
  %v16 = vstv %s10
  %17 = vst [vmem:[#allocation5] sm:$0x1] %v16
  loop: start=0, step=1, limit=11
  $region2: #{_lambda_.1} parent=0 // loop_pre_header
    _
  $region3: #{_lambda_.1} parent=0 // loop_header
    %s19 = sphi 0, %s23
    %p20 = scmp.ge.s32.totalorder %s19, 11
    %s26 = sphi 0, %s38
    %s27 = sphi 0, %s34
    %s28 = sphi 0, %s26
    %s29 = sphi 0, %s27
    %s30 = sphi 0, %s28
    %s31 = sphi 0, %s29
    %s45 = sphi 0, %s47
    %s48 = sphi 0, %s45
    %s49 = sphi 0, %s48
    %s65 = sphi 0, %s49
    %s69 = sphi 0, %s69
    %s71 = sphi 0, %s69
    %s72 = sphi 0, %s71
    %s86 = sphi 0, %s72
    %s90 = sphi 0, %s90
    %s92 = sphi 0, %s90
    %s93 = sphi 0, %s92
    %s107 = sphi 0, %s93
    %s111 = sphi 0, %s111
    %s113 = sphi 0, %s111
    %s114 = sphi 0, %s113
    %s128 = sphi 0, %s114
    %s132 = sphi 0, %s132
    %s134 = sphi 0, %s132
    %s135 = sphi 0, %s134
    %s149 = sphi 0, %s135
    %s153 = sphi 0, %s153
    %s155 = sphi 0, %s153
    %s156 = sphi 0, %s155
    %s170 = sphi 0, %s156
    %s174 = sphi 0, %s174
    %s176 = sphi 0, %s174
    %s177 = sphi 0, %s176
    %s191 = sphi 0, %s177
    %s195 = sphi 0, %s195
    %s197 = sphi 0, %s195
    %s198 = sphi 0, %s197
    %s212 = sphi 0, %s198
    %s216 = sphi 0, %s216
    %s218 = sphi 0, %s216
    %s219 = sphi 0, %s218
    %s233 = sphi 0, %s219
    %s237 = sphi 0, %s237
    %s239 = sphi 0, %s237
    %s240 = sphi 0, %s239
    %s254 = sphi 0, %s240
    %s258 = sphi 0, %s258
    %s260 = sphi 0, %s258
    %s261 = sphi 0, %s260
    %s275 = sphi 0, %s261
    %s285 = sphi 0, %s287
    %s288 = sphi 0, %s285
    %s289 = sphi 0, %s288
    %s305 = sphi 0, %s289
  $region4: #{_lambda_.1} parent=0 // loop_header_branch
    %22 = sbr.rel (%p20) target = $region8
  $region5: #{_lambda_.1} parent=0 // loop_body
    %s24 = ssub.s32 %s19, 1
    %s25 = ssub.s32 %s19, 2
    %s32 = sadd.s32 1, %s27
    %p33 = scmp.ge.s32.totalorder %s32, 3
    %s34 = scalar_select %p33, 0, %s32
    %s35 = sadd.s32 1, %s26
    %s36 = scalar_select %p33, %s35, %s26
    %p37 = scmp.ge.s32.totalorder %s36, 3
    %s38 = scalar_select %p37, 0, %s36
    %p39 = scmp.eq.s32.totalorder %s26, 0
    %s40 = scalar_select %p39, %s27, 2
    %p41 = scmp.eq.s32.totalorder %s38, 0
    %s42 = scalar_select %p41, %s34, 2
    %s43 = ssub.s32 %s40, %s42
    %p44 = scmp.eq.s32.totalorder %s43, 0
    %s46 = sadd.s32 %s45, 1
    %s47 = scalar_select %p44, %s45, %s46
    %p50 = pneg %p44
    %p51 = scmp.eq.s32.totalorder %s19, 8
    %p52 = por %p50, %p51
    %p53 = scmp.ne.s32.totalorder %s45, %s48
    %p54 = scmp.eq.s32.totalorder %s19, 0
    %p55 = por %p53, %p54
    %p56 = scmp.ne.s32.totalorder %s45, %s48
    %p57 = scmp.eq.s32.totalorder %s24, 8
    %p58 = por %p56, %p57
    %p59 = scmp.ne.s32.totalorder %s48, %s49
    %p60 = scmp.eq.s32.totalorder %s24, 0
    %p61 = por %p59, %p60
    %p62 = scmp.ne.s32.totalorder %s48, %s49
    %p63 = scmp.eq.s32.totalorder %s25, 8
    %p64 = por %p62, %p63
    %p66 = scmp.ne.s32.totalorder %s49, %s65
    %p67 = scmp.eq.s32.totalorder %s25, 0
    %p68 = por %p66, %p67
    %s70 = sadd.s32 %s69, 1
    %p73 = scmp.eq.s32.totalorder %s19, 8
    %p74 = scmp.ne.s32.totalorder %s69, %s71
    %p75 = scmp.eq.s32.totalorder %s19, 0
    %p76 = por %p74, %p75
    %p77 = scmp.ne.s32.totalorder %s69, %s71
    %p78 = scmp.eq.s32.totalorder %s24, 8
    %p79 = por %p77, %p78
    %p80 = scmp.ne.s32.totalorder %s71, %s72
    %p81 = scmp.eq.s32.totalorder %s24, 0
    %p82 = por %p80, %p81
    %p83 = scmp.ne.s32.totalorder %s71, %s72
    %p84 = scmp.eq.s32.totalorder %s25, 8
    %p85 = por %p83, %p84
    %p87 = scmp.ne.s32.totalorder %s72, %s86
    %p88 = scmp.eq.s32.totalorder %s25, 0
    %p89 = por %p87, %p88
    %s91 = sadd.s32 %s90, 1
    %p94 = scmp.eq.s32.totalorder %s19, 8
    %p95 = scmp.ne.s32.totalorder %s90, %s92
    %p96 = scmp.eq.s32.totalorder %s19, 0
    %p97 = por %p95, %p96
    %p98 = scmp.ne.s32.totalorder %s90, %s92
    %p99 = scmp.eq.s32.totalorder %s24, 8
    %p100 = por %p98, %p99
    %p101 = scmp.ne.s32.totalorder %s92, %s93
    %p102 = scmp.eq.s32.totalorder %s24, 0
    %p103 = por %p101, %p102
    %p104 = scmp.ne.s32.totalorder %s92, %s93
    %p105 = scmp.eq.s32.totalorder %s25, 8
    %p106 = por %p104, %p105
    %p108 = scmp.ne.s32.totalorder %s93, %s107
    %p109 = scmp.eq.s32.totalorder %s25, 0
    %p110 = por %p108, %p109
    %s112 = sadd.s32 %s111, 1
    %p115 = scmp.eq.s32.totalorder %s19, 8
    %p116 = scmp.ne.s32.totalorder %s111, %s113
    %p117 = scmp.eq.s32.totalorder %s19, 0
    %p118 = por %p116, %p117
    %p119 = scmp.ne.s32.totalorder %s111, %s113
    %p120 = scmp.eq.s32.totalorder %s24, 8
    %p121 = por %p119, %p120
    %p122 = scmp.ne.s32.totalorder %s113, %s114
    %p123 = scmp.eq.s32.totalorder %s24, 0
    %p124 = por %p122, %p123
    %p125 = scmp.ne.s32.totalorder %s113, %s114
    %p126 = scmp.eq.s32.totalorder %s25, 8
    %p127 = por %p125, %p126
    %p129 = scmp.ne.s32.totalorder %s114, %s128
    %p130 = scmp.eq.s32.totalorder %s25, 0
    %p131 = por %p129, %p130
    %s133 = sadd.s32 %s132, 1
    %p136 = scmp.eq.s32.totalorder %s19, 8
    %p137 = scmp.ne.s32.totalorder %s132, %s134
    %p138 = scmp.eq.s32.totalorder %s19, 0
    %p139 = por %p137, %p138
    %p140 = scmp.ne.s32.totalorder %s132, %s134
    %p141 = scmp.eq.s32.totalorder %s24, 8
    %p142 = por %p140, %p141
    %p143 = scmp.ne.s32.totalorder %s134, %s135
    %p144 = scmp.eq.s32.totalorder %s24, 0
    %p145 = por %p143, %p144
    %p146 = scmp.ne.s32.totalorder %s134, %s135
    %p147 = scmp.eq.s32.totalorder %s25, 8
    %p148 = por %p146, %p147
    %p150 = scmp.ne.s32.totalorder %s135, %s149
    %p151 = scmp.eq.s32.totalorder %s25, 0
    %p152 = por %p150, %p151
    %s154 = sadd.s32 %s153, 1
    %p157 = scmp.eq.s32.totalorder %s19, 8
    %p158 = scmp.ne.s32.totalorder %s153, %s155
    %p159 = scmp.eq.s32.totalorder %s19, 0
    %p160 = por %p158, %p159
    %p161 = scmp.ne.s32.totalorder %s153, %s155
    %p162 = scmp.eq.s32.totalorder %s24, 8
    %p163 = por %p161, %p162
    %p164 = scmp.ne.s32.totalorder %s155, %s156
    %p165 = scmp.eq.s32.totalorder %s24, 0
    %p166 = por %p164, %p165
    %p167 = scmp.ne.s32.totalorder %s155, %s156
    %p168 = scmp.eq.s32.totalorder %s25, 8
    %p169 = por %p167, %p168
    %p171 = scmp.ne.s32.totalorder %s156, %s170
    %p172 = scmp.eq.s32.totalorder %s25, 0
    %p173 = por %p171, %p172
    %s175 = sadd.s32 %s174, 1
    %p178 = scmp.eq.s32.totalorder %s19, 8
    %p179 = scmp.ne.s32.totalorder %s174, %s176
    %p180 = scmp.eq.s32.totalorder %s19, 0
    %p181 = por %p179, %p180
    %p182 = scmp.ne.s32.totalorder %s174, %s176
    %p183 = scmp.eq.s32.totalorder %s24, 8
    %p184 = por %p182, %p183
    %p185 = scmp.ne.s32.totalorder %s176, %s177
    %p186 = scmp.eq.s32.totalorder %s24, 0
    %p187 = por %p185, %p186
    %p188 = scmp.ne.s32.totalorder %s176, %s177
    %p189 = scmp.eq.s32.totalorder %s25, 8
    %p190 = por %p188, %p189
    %p192 = scmp.ne.s32.totalorder %s177, %s191
    %p193 = scmp.eq.s32.totalorder %s25, 0
    %p194 = por %p192, %p193
    %s196 = sadd.s32 %s195, 1
    %p199 = scmp.eq.s32.totalorder %s19, 8
    %p200 = scmp.ne.s32.totalorder %s195, %s197
    %p201 = scmp.eq.s32.totalorder %s19, 0
    %p202 = por %p200, %p201
    %p203 = scmp.ne.s32.totalorder %s195, %s197
    %p204 = scmp.eq.s32.totalorder %s24, 8
    %p205 = por %p203, %p204
    %p206 = scmp.ne.s32.totalorder %s197, %s198
    %p207 = scmp.eq.s32.totalorder %s24, 0
    %p208 = por %p206, %p207
    %p209 = scmp.ne.s32.totalorder %s197, %s198
    %p210 = scmp.eq.s32.totalorder %s25, 8
    %p211 = por %p209, %p210
    %p213 = scmp.ne.s32.totalorder %s198, %s212
    %p214 = scmp.eq.s32.totalorder %s25, 0
    %p215 = por %p213, %p214
    %s217 = sadd.s32 %s216, 1
    %p220 = scmp.eq.s32.totalorder %s19, 8
    %p221 = scmp.ne.s32.totalorder %s216, %s218
    %p222 = scmp.eq.s32.totalorder %s19, 0
    %p223 = por %p221, %p222
    %p224 = scmp.ne.s32.totalorder %s216, %s218
    %p225 = scmp.eq.s32.totalorder %s24, 8
    %p226 = por %p224, %p225
    %p227 = scmp.ne.s32.totalorder %s218, %s219
    %p228 = scmp.eq.s32.totalorder %s24, 0
    %p229 = por %p227, %p228
    %p230 = scmp.ne.s32.totalorder %s218, %s219
    %p231 = scmp.eq.s32.totalorder %s25, 8
    %p232 = por %p230, %p231
    %p234 = scmp.ne.s32.totalorder %s219, %s233
    %p235 = scmp.eq.s32.totalorder %s25, 0
    %p236 = por %p234, %p235
    %s238 = sadd.s32 %s237, 1
    %p241 = scmp.eq.s32.totalorder %s19, 8
    %p242 = scmp.ne.s32.totalorder %s237, %s239
    %p243 = scmp.eq.s32.totalorder %s19, 0
    %p244 = por %p242, %p243
    %p245 = scmp.ne.s32.totalorder %s237, %s239
    %p246 = scmp.eq.s32.totalorder %s24, 8
    %p247 = por %p245, %p246
    %p248 = scmp.ne.s32.totalorder %s239, %s240
    %p249 = scmp.eq.s32.totalorder %s24, 0
    %p250 = por %p248, %p249
    %p251 = scmp.ne.s32.totalorder %s239, %s240
    %p252 = scmp.eq.s32.totalorder %s25, 8
    %p253 = por %p251, %p252
    %p255 = scmp.ne.s32.totalorder %s240, %s254
    %p256 = scmp.eq.s32.totalorder %s25, 0
    %p257 = por %p255, %p256
    %s259 = sadd.s32 %s258, 1
    %p262 = scmp.eq.s32.totalorder %s19, 8
    %p263 = scmp.ne.s32.totalorder %s258, %s260
    %p264 = scmp.eq.s32.totalorder %s19, 0
    %p265 = por %p263, %p264
    %p266 = scmp.ne.s32.totalorder %s258, %s260
    %p267 = scmp.eq.s32.totalorder %s24, 8
    %p268 = por %p266, %p267
    %p269 = scmp.ne.s32.totalorder %s260, %s261
    %p270 = scmp.eq.s32.totalorder %s24, 0
    %p271 = por %p269, %p270
    %p272 = scmp.ne.s32.totalorder %s260, %s261
    %p273 = scmp.eq.s32.totalorder %s25, 8
    %p274 = por %p272, %p273
    %p276 = scmp.ne.s32.totalorder %s261, %s275
    %p277 = scmp.eq.s32.totalorder %s25, 0
    %p278 = por %p276, %p277
    %p279 = scmp.eq.s32.totalorder %s26, 2
    %s280 = scalar_select %p279, %s27, 0
    %p281 = scmp.eq.s32.totalorder %s38, 2
    %s282 = scalar_select %p281, %s34, 0
    %s283 = ssub.s32 %s280, %s282
    %p284 = scmp.eq.s32.totalorder %s283, 0
    %s286 = sadd.s32 %s285, 1
    %s287 = scalar_select %p284, %s285, %s286
    %p290 = pneg %p284
    %p291 = scmp.eq.s32.totalorder %s19, 8
    %p292 = por %p290, %p291
    %p293 = scmp.ne.s32.totalorder %s285, %s288
    %p294 = scmp.eq.s32.totalorder %s19, 0
    %p295 = por %p293, %p294
    %p296 = scmp.ne.s32.totalorder %s285, %s288
    %p297 = scmp.eq.s32.totalorder %s24, 8
    %p298 = por %p296, %p297
    %p299 = scmp.ne.s32.totalorder %s288, %s289
    %p300 = scmp.eq.s32.totalorder %s24, 0
    %p301 = por %p299, %p300
    %p302 = scmp.ne.s32.totalorder %s288, %s289
    %p303 = scmp.eq.s32.totalorder %s25, 8
    %p304 = por %p302, %p303
    %p306 = scmp.ne.s32.totalorder %s289, %s305
    %p307 = scmp.eq.s32.totalorder %s25, 0
    %p308 = por %p306, %p307
    %p309 = scmp.le.s32.totalorder 1, %s19
    %p310 = scmp.lt.s32.totalorder %s19, 10
    %p311 = pnand %p309, %p310
    %p312 = pneg %p311
    // Predicated region
    $region9: #{_lambda_.1} parent=5 // pred_check
      _
    $region10: #{_lambda_.1} parent=5 // pred_check_branch
      %314 = sbr.rel (%p311) target = $region12
    $region11: #{_lambda_.1} parent=5 // pred_region
      %s315 = ssub.s32 %s19, 1
      // Predicated region
      $region13: #{_lambda_.1} parent=11 // pred_check
        %p316 = pneg %p82
      $region14: #{_lambda_.1} parent=11 // pred_check_branch
        %318 = sbr.rel (%p316) target = $region16
      $region15: #{_lambda_.1} parent=11 // pred_region
        _
      $region16: #{_lambda_.1} parent=11 // pred_fallthru
        _
      // Predicated region
      $region17: #{_lambda_.1} parent=11 // pred_check
        %p319 = pneg %p103
      $region18: #{_lambda_.1} parent=11 // pred_check_branch
        %321 = sbr.rel (%p319) target = $region20
      $region19: #{_lambda_.1} parent=11 // pred_region
        _
      $region20: #{_lambda_.1} parent=11 // pred_fallthru
        _
      // Predicated region
      $region21: #{_lambda_.1} parent=11 // pred_check
        %p322 = pneg %p124
      $region22: #{_lambda_.1} parent=11 // pred_check_branch
        %324 = sbr.rel (%p322) target = $region24
      $region23: #{_lambda_.1} parent=11 // pred_region
        _
      $region24: #{_lambda_.1} parent=11 // pred_fallthru
        _
      // Predicated region
      $region25: #{_lambda_.1} parent=11 // pred_check
        %p325 = pneg %p145
      $region26: #{_lambda_.1} parent=11 // pred_check_branch
        %327 = sbr.rel (%p325) target = $region28
      $region27: #{_lambda_.1} parent=11 // pred_region
        _
      $region28: #{_lambda_.1} parent=11 // pred_fallthru
        _
      // Predicated region
      $region29: #{_lambda_.1} parent=11 // pred_check
        %p328 = pneg %p166
      $region30: #{_lambda_.1} parent=11 // pred_check_branch
        %330 = sbr.rel (%p328) target = $region32
      $region31: #{_lambda_.1} parent=11 // pred_region
        _
      $region32: #{_lambda_.1} parent=11 // pred_fallthru
        _
      // Predicated region
      $region33: #{_lambda_.1} parent=11 // pred_check
        %p331 = pneg %p187
      $region34: #{_lambda_.1} parent=11 // pred_check_branch
        %333 = sbr.rel (%p331) target = $region36
      $region35: #{_lambda_.1} parent=11 // pred_region
        _
      $region36: #{_lambda_.1} parent=11 // pred_fallthru
        _
      // Predicated region
      $region37: #{_lambda_.1} parent=11 // pred_check
        %p334 = pneg %p208
      $region38: #{_lambda_.1} parent=11 // pred_check_branch
        %336 = sbr.rel (%p334) target = $region40
      $region39: #{_lambda_.1} parent=11 // pred_region
        _
      $region40: #{_lambda_.1} parent=11 // pred_fallthru
        _
      // Predicated region
      $region41: #{_lambda_.1} parent=11 // pred_check
        %p337 = pneg %p229
      $region42: #{_lambda_.1} parent=11 // pred_check_branch
        %339 = sbr.rel (%p337) target = $region44
      $region43: #{_lambda_.1} parent=11 // pred_region
        _
      $region44: #{_lambda_.1} parent=11 // pred_fallthru
        _
      // Predicated region
      $region45: #{_lambda_.1} parent=11 // pred_check
        %p340 = pneg %p250
      $region46: #{_lambda_.1} parent=11 // pred_check_branch
        %342 = sbr.rel (%p340) target = $region48
      $region47: #{_lambda_.1} parent=11 // pred_region
        _
      $region48: #{_lambda_.1} parent=11 // pred_fallthru
        _
      // Predicated region
      $region49: #{_lambda_.1} parent=11 // pred_check
        %p343 = pneg %p271
      $region50: #{_lambda_.1} parent=11 // pred_check_branch
        %345 = sbr.rel (%p343) target = $region52
      $region51: #{_lambda_.1} parent=11 // pred_region
        _
      $region52: #{_lambda_.1} parent=11 // pred_fallthru
        _
    $region12: #{_lambda_.1} parent=5 // pred_fallthru
      _
    %p346 = scmp.lt.s32.totalorder %s19, 9
    // Predicated region
    $region53: #{_lambda_.1} parent=5 // pred_check
      %p347 = pneg %p346
    $region54: #{_lambda_.1} parent=5 // pred_check_branch
      %349 = sbr.rel (%p347) target = $region56
    $region55: #{_lambda_.1} parent=5 // pred_region
      // Predicated region
      $region57: #{_lambda_.1} parent=55 // pred_check
        %p350 = pneg %p55
      $region58: #{_lambda_.1} parent=55 // pred_check_branch
        %352 = sbr.rel (%p350) target = $region60
      $region59: #{_lambda_.1} parent=55 // pred_region
        %p353 = scmp.eq.s32.totalorder %s26, 0
        %s354 = scalar_select %p353, %s27, 2
        %p355 = scmp.lt.s32.totalorder %s354, 2
        %s356 = scalar_select %p355, %s354, 2
        %s357 = smul.addr %s356, 8
        %s358 = scalar_lea.vmem %s0, %s357
        %p359 = scmp.eq.s32.totalorder %s26, 0
        %s360 = scalar_select %p359, %s27, 2
      $region60: #{_lambda_.1} parent=55 // pred_fallthru
        _
    $region56: #{_lambda_.1} parent=5 // pred_fallthru
      _
    %p361 = scmp.le.s32.totalorder 1, %s19
    %p362 = scmp.lt.s32.totalorder %s19, 10
    %p363 = pnand %p361, %p362
    %p364 = pneg %p363
    // Predicated region
    $region61: #{_lambda_.1} parent=5 // pred_check
      _
    $region62: #{_lambda_.1} parent=5 // pred_check_branch
      %366 = sbr.rel (%p363) target = $region64
    $region63: #{_lambda_.1} parent=5 // pred_region
      %s367 = ssub.s32 %s19, 1
      %p368 = scmp.eq.s32.totalorder %s28, 0
      %s369 = scalar_select %p368, %s29, 2
      %p370 = scmp.lt.s32.totalorder %s369, 2
      %s371 = scalar_select %p370, %s369, 2
      %s372 = smul.addr %s371, 8
      %s373 = scalar_lea.vmem %s0, %s372
      %p374 = pneg %p61
      %p375 = pneg %p58
      %p376 = pneg %p82
      %p377 = pneg %p79
      %p378 = pneg %p103
      %p379 = pneg %p100
      %p380 = pneg %p124
      %p381 = pneg %p121
      %p382 = pneg %p145
      %p383 = pneg %p142
      %p384 = pneg %p166
      %p385 = pneg %p163
      %p386 = pneg %p187
      %p387 = pneg %p184
      %p388 = pneg %p208
      %p389 = pneg %p205
      %p390 = pneg %p229
      %p391 = pneg %p226
      %p392 = pneg %p250
      %p393 = pneg %p247
      %p394 = pneg %p271
      %p395 = pneg %p268
      %p396 = pneg %p301
      %p397 = pneg %p298
      %p398 = scmp.eq.s32.totalorder %s28, 2
      %s399 = scalar_select %p398, %s29, 0
      %p400 = scmp.lt.s32.totalorder %s399, 2
      %s401 = scalar_select %p400, %s399, 2
      %s402 = smul.addr %s401, 8
      %s403 = scalar_lea.vmem %s11, %s402
      %p404 = scmp.eq.s32.totalorder %s28, 0
      %s405 = scalar_select %p404, %s29, 2
      %p406 = scmp.lt.s32.totalorder %s405, 2
      %s407 = scalar_select %p406, %s405, 2
      %s408 = smul.addr %s407, 8
      %s409 = scalar_lea.vmem %s0, %s408
      %p410 = scmp.eq.s32.totalorder %s28, 0
      %s411 = scalar_select %p410, %s29, 2
      %p412 = scmp.eq.s32.totalorder %s28, 2
      %s413 = scalar_select %p412, %s29, 0
      %p414 = scmp.lt.s32.totalorder %s413, 2
      %s415 = scalar_select %p414, %s413, 2
      %s416 = smul.addr %s415, 8
      %s417 = scalar_lea.vmem %s11, %s416
      %p418 = scmp.eq.s32.totalorder %s28, 2
      %s419 = scalar_select %p418, %s29, 0
      %s420 = smul.u32 %s29, 8
      %p421 = scmp.eq.s32.totalorder %s28, 0
      // Predicated region
      $region65: #{_lambda_.1} parent=63 // pred_check
        %p422 = pneg %p421
      $region66: #{_lambda_.1} parent=63 // pred_check_branch
        %424 = sbr.rel (%p422) target = $region68
      $region67: #{_lambda_.1} parent=63 // pred_region
        %p425 = scmp.eq.s32.totalorder %s29, 0
        // Predicated region
        $region69: #{_lambda_.1} parent=67 // pred_check
          %p426 = pneg %p425
        $region70: #{_lambda_.1} parent=67 // pred_check_branch
          %428 = sbr.rel (%p426) target = $region72
        $region71: #{_lambda_.1} parent=67 // pred_region
          %vm429 = vcmask 516096
          %430 = vst.msk [vmem:[#allocation2] sm:$0x1] %vm429, 0.0
          %431 = vst.msk [vmem:[#allocation3] sm:$0x1] %vm429, 0.0
          %vm432 = vcmask 7168
          %433 = vst.msk [vmem:[%s417] sm:$0xff] %vm432, 0.0
        $region72: #{_lambda_.1} parent=67 // pred_fallthru
          _
        %v434 = vld [vmem:[%s409] sm:$0xff]
        %v435 = vld [vmem:[%s1] sm:$0xff]
        %v436 = vld [vmem:[%s1 + $0x8] sm:$0xff]
        %v437 = vld [vmem:[%s1 + $0x10] sm:$0xff]
        %v438 = vld [vmem:[%s1 + $0x18] sm:$0xff]
        %v439 = vld [vmem:[%s1 + $0x20] sm:$0xff]
        %v440 = vld [vmem:[%s1 + $0x28] sm:$0xff]
        %v441 = vld [vmem:[%s1 + $0x30] sm:$0xff]
        %v442 = vld [vmem:[%s1 + $0x38] sm:$0xff]
        %v443 = vld [vmem:[%s1 + $0x40] sm:$0xff]
        %v444 = vld [vmem:[%s1 + $0x48] sm:$0xff]
        %v445 = vld [vmem:[%s1 + $0x50] sm:$0xff]
        %v446 = vld [vmem:[%s1 + $0x58] sm:$0xff]
        %v447 = vld [vmem:[%s1 + $0x60] sm:$0xff]
        %v448 = vld [vmem:[%s1 + $0x68] sm:$0xff]
        %v449 = vld [vmem:[%s1 + $0x70] sm:$0xff]
        %v450 = vld [vmem:[%s1 + $0x78] sm:$0xff]
        %v451 = vld [vmem:[%s1 + $0x80] sm:$0xff]
        %v452 = vld [vmem:[%s1 + $0x88] sm:$0xff]
        %v453 = vld [vmem:[%s1 + $0x90] sm:$0xff]
        %v454 = vld [vmem:[%s1 + $0x98] sm:$0xff]
        %v455 = vld [vmem:[%s1 + $0xa0] sm:$0xff]
        %v456 = vld [vmem:[%s1 + $0xa8] sm:$0xff]
        %v457 = vld [vmem:[%s1 + $0xb0] sm:$0xff]
        %v458 = vld [vmem:[%s1 + $0xb8] sm:$0xff]
        %v459 = vld [vmem:[%s1 + $0xc0] sm:$0xff]
        %v460 = vld [vmem:[%s1 + $0xc8] sm:$0xff]
        %v461 = vld [vmem:[%s1 + $0xd0] sm:$0xff]
        %v462 = vld [vmem:[%s1 + $0xd8] sm:$0xff]
        %v463 = vld [vmem:[%s1 + $0xe0] sm:$0xff]
        %v464 = vld [vmem:[%s1 + $0xe8] sm:$0xff]
        %v465 = vld [vmem:[%s1 + $0xf0] sm:$0xf]
        %v466 = vld [vmem:[%s1 + $0xf8] sm:$0xf]
        %v467 = vld [vmem:[%s1 + $0x100] sm:$0xf]
        %v468 = vld [vmem:[%s2] sm:$0x7]
        %v470 = vlaneseq
        %v471 = vshrl.u32 %v470, 7
        %v472 = vsub.s32 0, %v471
        %v473 = vrot.slane %v468, %v472
        %v474 = vlaneseq
        %v475 = vshrl.u32 %v474, 7
        %v476 = vsub.s32 1, %v475
        %v477 = vrot.slane %v468, %v476
        %v478 = vlaneseq
        %v479 = vshrl.u32 %v478, 7
        %v480 = vsub.s32 2, %v479
        %v481 = vrot.slane %v468, %v480
        %vm485 = vcmask 687104
        %v487 = vsel %vm485, %v434, 0
        %vm489 = vcmask 1043456
        %v491 = vsel %vm489, %v465, 0
        %v494 = vsel %vm489, %v466, 0
        %v497 = vsel %vm489, %v467, 0
        %499 = vmatprep.subr.mxu0 %v436
        %500 = vmatpush1.msra.mxu0 %v435
        %501 = vmatprep.subr.mxu0 %v439
        %502 = vmatpush1.msra.mxu0 %v438
        %503 = vmatprep.subr.mxu0 %v442
        %504 = vmatpush1.msra.mxu0 %v441
        %505 = vmatprep.subr.mxu0 %v445
        %506 = vmatpush1.msra.mxu0 %v444
        %507 = vmatprep.subr.mxu0 %v448
        %508 = vmatpush1.msra.mxu0 %v447
        %509 = vmatprep.subr.mxu0 %v451
        %510 = vmatpush1.msra.mxu0 %v450
        %511 = vmatprep.subr.mxu0 %v454
        %512 = vmatpush1.msra.mxu0 %v453
        %513 = vmatprep.subr.mxu0 %v457
        %514 = vmatpush1.msra.mxu0 %v456
        %515 = vmatprep.subr.mxu0 %v460
        %516 = vmatpush1.msra.mxu0 %v459
        %517 = vmatprep.subr.mxu0 %v463
        %518 = vmatpush1.msra.mxu0 %v462
        %519 = vmatprep.subr.mxu0 %v494
        %520 = vmatpush1.msra.mxu0 %v491
        %521 = vmatprep.subr.mxu0 0.0
        %522 = vmatpush1.msra.mxu0 0.0
        %523 = vmatprep.subr.mxu0 0.0
        %524 = vmatpush1.msra.mxu0 0.0
        %525 = vmatprep.subr.mxu0 0.0
        %526 = vmatpush1.msra.mxu0 0.0
        %527 = vmatprep.subr.mxu0 0.0
        %528 = vmatpush1.msra.mxu0 0.0
        %529 = vmatprep.subr.mxu0 0.0
        %530 = vmatpush1.msra.mxu0 0.0
        %531 = vmatprep.subr.mxu0 0.0
        %532 = vmatpush1.msra.mxu0 0.0
        %533 = vmatprep.subr.mxu0 0.0
        %534 = vmatpush1.msra.mxu0 0.0
        %535 = vmatprep.subr.mxu0 0.0
        %536 = vmatpush1.msra.mxu0 0.0
        %537 = vmatprep.subr.mxu0 0.0
        %538 = vmatpush1.msra.mxu0 0.0
        %539 = vmatprep.subr.mxu0 0.0
        %540 = vmatpush1.msra.mxu0 0.0
        %541 = vmatprep.subr.mxu0 0.0
        %542 = vmatpush1.msra.mxu0 0.0
        %543 = vmatprep.subr.mxu0 0.0
        %544 = vmatpush1.msra.mxu0 0.0
        %545 = vmatprep.subr.mxu0 0.0
        %546 = vmatpush1.msra.mxu0 0.0
        %547 = vmatprep.subr.mxu0 0.0
        %548 = vmatpush1.msra.mxu0 0.0
        %549 = vmatprep.subr.mxu0 0.0
        %550 = vmatpush1.msra.mxu0 0.0
        %551 = vmatprep.subr.mxu0 0.0
        %552 = vmatpush1.msra.mxu0 0.0
        %553 = vmatprep.subr.mxu0 0.0
        %554 = vmatpush1.msra.mxu0 0.0
        %555 = vmatprep.subr.mxu0 0.0
        %556 = vmatpush1.msra.mxu0 0.0
        %557 = vmatprep.subr.mxu0 0.0
        %558 = vmatpush1.msra.mxu0 0.0
        %559 = vmatprep.subr.mxu0 0.0
        %560 = vmatpush1.msra.mxu0 0.0
        %561 = vmatprep.subr.mxu0 0.0
        %562 = vmatpush1.msra.mxu0 0.0
        %563 = vmatprep.mubr.f32.mxu0 0.0
        %564 = vmatmul.mubr.f32.gmra.mrb[0].mxu0 %v487
        %v565 = vpop.f32.mrb[0].mxu0
        %v566 = vadd.f32 %v473, %v565
        %v567 = vpop.f32.mrb[0].mxu0
        %v568 = vadd.f32 %v477, %v567
        %569 = vdwg.mxu0
        %570 = vmatprep.subr.mxu0 0.0
        %571 = vmatpush1.msra.mxu0 %v437
        %572 = vmatprep.subr.mxu0 0.0
        %573 = vmatpush1.msra.mxu0 %v440
        %574 = vmatprep.subr.mxu0 0.0
        %575 = vmatpush1.msra.mxu0 %v443
        %576 = vmatprep.subr.mxu0 0.0
        %577 = vmatpush1.msra.mxu0 %v446
        %578 = vmatprep.subr.mxu0 0.0
        %579 = vmatpush1.msra.mxu0 %v449
        %580 = vmatprep.subr.mxu0 0.0
        %581 = vmatpush1.msra.mxu0 %v452
        %582 = vmatprep.subr.mxu0 0.0
        %583 = vmatpush1.msra.mxu0 %v455
        %584 = vmatprep.subr.mxu0 0.0
        %585 = vmatpush1.msra.mxu0 %v458
        %586 = vmatprep.subr.mxu0 0.0
        %587 = vmatpush1.msra.mxu0 %v461
        %588 = vmatprep.subr.mxu0 0.0
        %589 = vmatpush1.msra.mxu0 %v464
        %590 = vmatprep.subr.mxu0 0.0
        %591 = vmatpush1.msra.mxu0 %v497
        %592 = vmatprep.subr.mxu0 0.0
        %593 = vmatpush1.msra.mxu0 0.0
        %594 = vmatprep.subr.mxu0 0.0
        %595 = vmatpush1.msra.mxu0 0.0
        %596 = vmatprep.subr.mxu0 0.0
        %597 = vmatpush1.msra.mxu0 0.0
        %598 = vmatprep.subr.mxu0 0.0
        %599 = vmatpush1.msra.mxu0 0.0
        %600 = vmatprep.subr.mxu0 0.0
        %601 = vmatpush1.msra.mxu0 0.0
        %602 = vmatprep.subr.mxu0 0.0
        %603 = vmatpush1.msra.mxu0 0.0
        %604 = vmatprep.subr.mxu0 0.0
        %605 = vmatpush1.msra.mxu0 0.0
        %606 = vmatprep.subr.mxu0 0.0
        %607 = vmatpush1.msra.mxu0 0.0
        %608 = vmatprep.subr.mxu0 0.0
        %609 = vmatpush1.msra.mxu0 0.0
        %610 = vmatprep.subr.mxu0 0.0
        %611 = vmatpush1.msra.mxu0 0.0
        %612 = vmatprep.subr.mxu0 0.0
        %613 = vmatpush1.msra.mxu0 0.0
        %614 = vmatprep.subr.mxu0 0.0
        %615 = vmatpush1.msra.mxu0 0.0
        %616 = vmatprep.subr.mxu0 0.0
        %617 = vmatpush1.msra.mxu0 0.0
        %618 = vmatprep.subr.mxu0 0.0
        %619 = vmatpush1.msra.mxu0 0.0
        %620 = vmatprep.subr.mxu0 0.0
        %621 = vmatpush1.msra.mxu0 0.0
        %622 = vmatprep.subr.mxu0 0.0
        %623 = vmatpush1.msra.mxu0 0.0
        %624 = vmatprep.subr.mxu0 0.0
        %625 = vmatpush1.msra.mxu0 0.0
        %626 = vmatprep.subr.mxu0 0.0
        %627 = vmatpush1.msra.mxu0 0.0
        %628 = vmatprep.subr.mxu0 0.0
        %629 = vmatpush1.msra.mxu0 0.0
        %630 = vmatprep.subr.mxu0 0.0
        %631 = vmatpush1.msra.mxu0 0.0
        %632 = vmatprep.subr.mxu0 0.0
        %633 = vmatpush1.msra.mxu0 0.0
        %634 = vmatprep.mubr.f32.mxu0 0.0
        %635 = vmatmul.mubr.f32.gmra.mrb[0].mxu0 %v487
        %v636 = vpop.f32.mrb[0].mxu0
        %v637 = vadd.f32 %v481, %v636
        %v638 = vpop.f32.mrb[0].mxu0
        %639 = vdwg.mxu0
        %vm640 = vcmp.gt.f32.partialorder %v566, 0.0
        %vm641 = vcmp.gt.f32.partialorder %v568, 0.0
        %vm642 = vcmp.gt.f32.partialorder %v637, 0.0
        %v643 = vmul.f32 %v566, 0.01
        %v644 = vmul.f32 %v568, 0.01
        %v645 = vmul.f32 %v637, 0.01
        %v646 = vsel %vm640, %v566, %v643
        %v647 = vsel %vm641, %v568, %v644
        %v648 = vsel %vm642, %v637, %v645
        %v649 = vld [vmem:[%s3] sm:$0xff]
        %v650 = vld [vmem:[%s3 + $0x8] sm:$0xff]
        %v651 = vld [vmem:[%s3 + $0x10] sm:$0xff]
        %v652 = vld [vmem:[%s3 + $0x18] sm:$0xff]
        %v653 = vld [vmem:[%s3 + $0x20] sm:$0xff]
        %v654 = vld [vmem:[%s3 + $0x28] sm:$0xff]
        %v655 = vld [vmem:[%s3 + $0x30] sm:$0xff]
        %v656 = vld [vmem:[%s3 + $0x38] sm:$0xff]
        %v657 = vld [vmem:[%s3 + $0x40] sm:$0xff]
        %v658 = vld [vmem:[%s3 + $0x48] sm:$0xff]
        %v659 = vld [vmem:[%s3 + $0x50] sm:$0xff]
        %v660 = vld [vmem:[%s3 + $0x58] sm:$0xff]
        %v661 = vld [vmem:[%s3 + $0x60] sm:$0xff]
        %v662 = vld [vmem:[%s3 + $0x68] sm:$0xff]
        %v663 = vld [vmem:[%s3 + $0x70] sm:$0xff]
        %v664 = vld [vmem:[%s3 + $0x78] sm:$0xff]
        %v665 = vld [vmem:[%s3 + $0x80] sm:$0xff]
        %v666 = vld [vmem:[%s3 + $0x88] sm:$0xff]
        %v667 = vld [vmem:[%s3 + $0x90] sm:$0xff]
        %v668 = vld [vmem:[%s3 + $0x98] sm:$0xff]
        %v669 = vld [vmem:[%s3 + $0xa0] sm:$0xff]
        %v670 = vld [vmem:[%s3 + $0xa8] sm:$0xff]
        %v671 = vld [vmem:[%s3 + $0xb0] sm:$0xff]
        %v672 = vld [vmem:[%s3 + $0xb8] sm:$0xff]
        %v673 = vld [vmem:[%s3 + $0xc0] sm:$0xff]
        %v674 = vld [vmem:[%s3 + $0xc8] sm:$0xff]
        %v675 = vld [vmem:[%s3 + $0xd0] sm:$0xff]
        %v676 = vld [vmem:[%s3 + $0xd8] sm:$0xff]
        %v677 = vld [vmem:[%s3 + $0xe0] sm:$0xff]
        %v678 = vld [vmem:[%s3 + $0xe8] sm:$0xff]
        %v679 = vld [vmem:[%s3 + $0xf0] sm:$0xff]
        %v680 = vld [vmem:[%s3 + $0xf8] sm:$0xff]
        %v681 = vld [vmem:[%s3 + $0x100] sm:$0xff]
        %v682 = vld [vmem:[%s3 + $0x108] sm:$0xff]
        %v683 = vld [vmem:[%s3 + $0x110] sm:$0xff]
        %v684 = vld [vmem:[%s3 + $0x118] sm:$0xff]
        %v685 = vld [vmem:[%s3 + $0x120] sm:$0xff]
        %v686 = vld [vmem:[%s3 + $0x128] sm:$0xff]
        %v687 = vld [vmem:[%s3 + $0x130] sm:$0xff]
        %v688 = vld [vmem:[%s3 + $0x138] sm:$0xff]
        %v689 = vld [vmem:[%s3 + $0x140] sm:$0xff]
        %v690 = vld [vmem:[%s3 + $0x148] sm:$0xff]
        %v691 = vld [vmem:[%s3 + $0x150] sm:$0xff]
        %v692 = vld [vmem:[%s3 + $0x158] sm:$0xff]
        %v693 = vld [vmem:[%s3 + $0x160] sm:$0xff]
        %v694 = vld [vmem:[%s3 + $0x168] sm:$0xff]
        %v695 = vld [vmem:[%s3 + $0x170] sm:$0xff]
        %v696 = vld [vmem:[%s3 + $0x178] sm:$0xff]
        %v697 = vld [vmem:[%s4] sm:$0x1]
        %v699 = vlaneseq
        %v700 = vshrl.u32 %v699, 7
        %v701 = vsub.s32 0, %v700
        %v702 = vrot.slane %v697, %v701
        %704 = vmatprep.subr.mxu0 0.0
        %705 = vmatpush1.msra.mxu0 %v649
        %706 = vmatprep.subr.mxu0 0.0
        %707 = vmatpush1.msra.mxu0 %v650
        %708 = vmatprep.subr.mxu0 0.0
        %709 = vmatpush1.msra.mxu0 %v651
        %710 = vmatprep.subr.mxu0 0.0
        %711 = vmatpush1.msra.mxu0 %v652
        %712 = vmatprep.subr.mxu0 0.0
        %713 = vmatpush1.msra.mxu0 %v653
        %714 = vmatprep.subr.mxu0 0.0
        %715 = vmatpush1.msra.mxu0 %v654
        %716 = vmatprep.subr.mxu0 0.0
        %717 = vmatpush1.msra.mxu0 %v655
        %718 = vmatprep.subr.mxu0 0.0
        %719 = vmatpush1.msra.mxu0 %v656
        %720 = vmatprep.subr.mxu0 0.0
        %721 = vmatpush1.msra.mxu0 %v657
        %722 = vmatprep.subr.mxu0 0.0
        %723 = vmatpush1.msra.mxu0 %v658
        %724 = vmatprep.subr.mxu0 0.0
        %725 = vmatpush1.msra.mxu0 %v659
        %726 = vmatprep.subr.mxu0 0.0
        %727 = vmatpush1.msra.mxu0 %v660
        %728 = vmatprep.subr.mxu0 0.0
        %729 = vmatpush1.msra.mxu0 %v661
        %730 = vmatprep.subr.mxu0 0.0
        %731 = vmatpush1.msra.mxu0 %v662
        %732 = vmatprep.subr.mxu0 0.0
        %733 = vmatpush1.msra.mxu0 %v663
        %734 = vmatprep.subr.mxu0 0.0
        %735 = vmatpush1.msra.mxu0 %v664
        %736 = vmatprep.subr.mxu0 0.0
        %737 = vmatpush1.msra.mxu0 %v665
        %738 = vmatprep.subr.mxu0 0.0
        %739 = vmatpush1.msra.mxu0 %v666
        %740 = vmatprep.subr.mxu0 0.0
        %741 = vmatpush1.msra.mxu0 %v667
        %742 = vmatprep.subr.mxu0 0.0
        %743 = vmatpush1.msra.mxu0 %v668
        %744 = vmatprep.subr.mxu0 0.0
        %745 = vmatpush1.msra.mxu0 %v669
        %746 = vmatprep.subr.mxu0 0.0
        %747 = vmatpush1.msra.mxu0 %v670
        %748 = vmatprep.subr.mxu0 0.0
        %749 = vmatpush1.msra.mxu0 %v671
        %750 = vmatprep.subr.mxu0 0.0
        %751 = vmatpush1.msra.mxu0 %v672
        %752 = vmatprep.subr.mxu0 0.0
        %753 = vmatpush1.msra.mxu0 %v673
        %754 = vmatprep.subr.mxu0 0.0
        %755 = vmatpush1.msra.mxu0 %v674
        %756 = vmatprep.subr.mxu0 0.0
        %757 = vmatpush1.msra.mxu0 %v675
        %758 = vmatprep.subr.mxu0 0.0
        %759 = vmatpush1.msra.mxu0 %v676
        %760 = vmatprep.subr.mxu0 0.0
        %761 = vmatpush1.msra.mxu0 %v677
        %762 = vmatprep.subr.mxu0 0.0
        %763 = vmatpush1.msra.mxu0 %v678
        %764 = vmatprep.subr.mxu0 0.0
        %765 = vmatpush1.msra.mxu0 %v679
        %766 = vmatprep.subr.mxu0 0.0
        %767 = vmatpush1.msra.mxu0 %v680
        %768 = vmatprep.mubr.f32.mxu0 %v647
        %769 = vmatmul.mubr.f32.gmra.mrb[0].mxu0 %v646
        %v770 = vpop.f32.mrb[0].mxu0
        %v771 = vadd.f32 %v702, %v770
        %v772 = vpop.f32.mrb[0].mxu0
        %773 = vdwg.mxu0
        %774 = vmatprep.subr.mxu0 0.0
        %775 = vmatpush1.msra.mxu0 %v681
        %776 = vmatprep.subr.mxu0 0.0
        %777 = vmatpush1.msra.mxu0 %v682
        %778 = vmatprep.subr.mxu0 0.0
        %779 = vmatpush1.msra.mxu0 %v683
        %780 = vmatprep.subr.mxu0 0.0
        %781 = vmatpush1.msra.mxu0 %v684
        %782 = vmatprep.subr.mxu0 0.0
        %783 = vmatpush1.msra.mxu0 %v685
        %784 = vmatprep.subr.mxu0 0.0
        %785 = vmatpush1.msra.mxu0 %v686
        %786 = vmatprep.subr.mxu0 0.0
        %787 = vmatpush1.msra.mxu0 %v687
        %788 = vmatprep.subr.mxu0 0.0
        %789 = vmatpush1.msra.mxu0 %v688
        %790 = vmatprep.subr.mxu0 0.0
        %791 = vmatpush1.msra.mxu0 %v689
        %792 = vmatprep.subr.mxu0 0.0
        %793 = vmatpush1.msra.mxu0 %v690
        %794 = vmatprep.subr.mxu0 0.0
        %795 = vmatpush1.msra.mxu0 %v691
        %796 = vmatprep.subr.mxu0 0.0
        %797 = vmatpush1.msra.mxu0 %v692
        %798 = vmatprep.subr.mxu0 0.0
        %799 = vmatpush1.msra.mxu0 %v693
        %800 = vmatprep.subr.mxu0 0.0
        %801 = vmatpush1.msra.mxu0 %v694
        %802 = vmatprep.subr.mxu0 0.0
        %803 = vmatpush1.msra.mxu0 %v695
        %804 = vmatprep.subr.mxu0 0.0
        %805 = vmatpush1.msra.mxu0 %v696
        %806 = vmatprep.subr.mxu0 0.0
        %807 = vmatpush1.msra.mxu0 0.0
        %808 = vmatprep.subr.mxu0 0.0
        %809 = vmatpush1.msra.mxu0 0.0
        %810 = vmatprep.subr.mxu0 0.0
        %811 = vmatpush1.msra.mxu0 0.0
        %812 = vmatprep.subr.mxu0 0.0
        %813 = vmatpush1.msra.mxu0 0.0
        %814 = vmatprep.subr.mxu0 0.0
        %815 = vmatpush1.msra.mxu0 0.0
        %816 = vmatprep.subr.mxu0 0.0
        %817 = vmatpush1.msra.mxu0 0.0
        %818 = vmatprep.subr.mxu0 0.0
        %819 = vmatpush1.msra.mxu0 0.0
        %820 = vmatprep.subr.mxu0 0.0
        %821 = vmatpush1.msra.mxu0 0.0
        %822 = vmatprep.subr.mxu0 0.0
        %823 = vmatpush1.msra.mxu0 0.0
        %824 = vmatprep.subr.mxu0 0.0
        %825 = vmatpush1.msra.mxu0 0.0
        %826 = vmatprep.subr.mxu0 0.0
        %827 = vmatpush1.msra.mxu0 0.0
        %828 = vmatprep.subr.mxu0 0.0
        %829 = vmatpush1.msra.mxu0 0.0
        %830 = vmatprep.subr.mxu0 0.0
        %831 = vmatpush1.msra.mxu0 0.0
        %832 = vmatprep.subr.mxu0 0.0
        %833 = vmatpush1.msra.mxu0 0.0
        %834 = vmatprep.subr.mxu0 0.0
        %835 = vmatpush1.msra.mxu0 0.0
        %836 = vmatprep.subr.mxu0 0.0
        %837 = vmatpush1.msra.mxu0 0.0
        %838 = vmatprep.mubr.f32.mxu0 0.0
        %839 = vmatmul.mubr.f32.gmra.mrb[0].mxu0 %v648
        %v840 = vpop.f32.mrb[0].mxu0
        %v841 = vadd.f32 %v771, %v840
        %v842 = vpop.f32.mrb[0].mxu0
        %843 = vdwg.mxu0
        %vm844 = vcmp.gt.f32.partialorder %v841, 0.0
        %v845 = vmul.f32 %v841, 0.01
        %v846 = vsel %vm844, %v841, %v845
        %v847 = vld [vmem:[%s5] sm:$0xff]
        %v848 = vld [vmem:[%s5 + $0x8] sm:$0xff]
        %v849 = vld [vmem:[%s5 + $0x10] sm:$0xff]
        %v850 = vld [vmem:[%s5 + $0x18] sm:$0xff]
        %v851 = vld [vmem:[%s5 + $0x20] sm:$0xff]
        %v852 = vld [vmem:[%s5 + $0x28] sm:$0xff]
        %v853 = vld [vmem:[%s6] sm:$0x1]
        %v855 = vlaneseq
        %v856 = vshrl.u32 %v855, 7
        %v857 = vsub.s32 0, %v856
        %v858 = vrot.slane %v853, %v857
        %vm860 = vcmask 392192
        %v862 = vsel %vm860, %v846, 0
        %864 = vmatprep.subr.mxu0 0.0
        %865 = vmatpush1.msra.mxu0 %v847
        %866 = vmatprep.subr.mxu0 0.0
        %867 = vmatpush1.msra.mxu0 %v848
        %868 = vmatprep.subr.mxu0 0.0
        %869 = vmatpush1.msra.mxu0 %v849
        %870 = vmatprep.subr.mxu0 0.0
        %871 = vmatpush1.msra.mxu0 %v850
        %872 = vmatprep.subr.mxu0 0.0
        %873 = vmatpush1.msra.mxu0 %v851
        %874 = vmatprep.subr.mxu0 0.0
        %875 = vmatpush1.msra.mxu0 %v852
        %876 = vmatprep.subr.mxu0 0.0
        %877 = vmatpush1.msra.mxu0 0.0
        %878 = vmatprep.subr.mxu0 0.0
        %879 = vmatpush1.msra.mxu0 0.0
        %880 = vmatprep.subr.mxu0 0.0
        %881 = vmatpush1.msra.mxu0 0.0
        %882 = vmatprep.subr.mxu0 0.0
        %883 = vmatpush1.msra.mxu0 0.0
        %884 = vmatprep.subr.mxu0 0.0
        %885 = vmatpush1.msra.mxu0 0.0
        %886 = vmatprep.subr.mxu0 0.0
        %887 = vmatpush1.msra.mxu0 0.0
        %888 = vmatprep.subr.mxu0 0.0
        %889 = vmatpush1.msra.mxu0 0.0
        %890 = vmatprep.subr.mxu0 0.0
        %891 = vmatpush1.msra.mxu0 0.0
        %892 = vmatprep.subr.mxu0 0.0
        %893 = vmatpush1.msra.mxu0 0.0
        %894 = vmatprep.subr.mxu0 0.0
        %895 = vmatpush1.msra.mxu0 0.0
        %896 = vmatprep.subr.mxu0 0.0
        %897 = vmatpush1.msra.mxu0 0.0
        %898 = vmatprep.subr.mxu0 0.0
        %899 = vmatpush1.msra.mxu0 0.0
        %900 = vmatprep.subr.mxu0 0.0
        %901 = vmatpush1.msra.mxu0 0.0
        %902 = vmatprep.subr.mxu0 0.0
        %903 = vmatpush1.msra.mxu0 0.0
        %904 = vmatprep.subr.mxu0 0.0
        %905 = vmatpush1.msra.mxu0 0.0
        %906 = vmatprep.subr.mxu0 0.0
        %907 = vmatpush1.msra.mxu0 0.0
        %908 = vmatprep.subr.mxu0 0.0
        %909 = vmatpush1.msra.mxu0 0.0
        %910 = vmatprep.subr.mxu0 0.0
        %911 = vmatpush1.msra.mxu0 0.0
        %912 = vmatprep.subr.mxu0 0.0
        %913 = vmatpush1.msra.mxu0 0.0
        %914 = vmatprep.subr.mxu0 0.0
        %915 = vmatpush1.msra.mxu0 0.0
        %916 = vmatprep.subr.mxu0 0.0
        %917 = vmatpush1.msra.mxu0 0.0
        %918 = vmatprep.subr.mxu0 0.0
        %919 = vmatpush1.msra.mxu0 0.0
        %920 = vmatprep.subr.mxu0 0.0
        %921 = vmatpush1.msra.mxu0 0.0
        %922 = vmatprep.subr.mxu0 0.0
        %923 = vmatpush1.msra.mxu0 0.0
        %924 = vmatprep.subr.mxu0 0.0
        %925 = vmatpush1.msra.mxu0 0.0
        %926 = vmatprep.subr.mxu0 0.0
        %927 = vmatpush1.msra.mxu0 0.0
        %928 = vmatprep.mubr.f32.mxu0 0.0
        %929 = vmatmul.mubr.f32.gmra.mrb[0].mxu0 %v862
        %v930 = vpop.f32.mrb[0].mxu0
        %v931 = vadd.f32 %v858, %v930
        %v932 = vpop.f32.mrb[0].mxu0
        %933 = vdwg.mxu0
        %s934 = scalar_lea.vmem [#allocation4], %s420
        %vm935 = vcmask 523264
        %936 = vst.msk [vmem:[%s934] sm:$0xff] %vm935, %v931
        %v937 = vlaneseq
        %v938 = vshrl.u32 %v937, 7
        %v939 = vstv %s420
        %v940 = vadd.s32 %v939, %v938
        %vm941 = vcmp.lt.s32.totalorder %v940, 21
        %v942 = vsel %vm941, 1, 0
        %v943 = vcvt.s32.f32 %v942
        %v944 = vmul.f32 %v931, %v943
        %v945 = vld [vmem:[#allocation2] sm:$0x1]
        %v946 = vsel %vm935, %v944, 0.0
        %v947 = vrot.slane %v946, 4
        %v948 = vadd.f32 %v946, %v947
        %v949 = vrot.slane %v948, 2
        %v950 = vadd.f32 %v948, %v949
        %v951 = vrot.slane %v950, 1
        %v952 = vadd.f32 %v950, %v951
        %v953 = vadd.f32 %v945, %v952
        %vm954 = vcmask 516096
        %955 = vst.msk [vmem:[#allocation2] sm:$0x1] %vm954, %v953
        %p956 = scmp.eq.s32.totalorder %s29, 2
        // Predicated region
        $region73: #{_lambda_.1} parent=67 // pred_check
          %p957 = pneg %p956
        $region74: #{_lambda_.1} parent=67 // pred_check_branch
          %959 = sbr.rel (%p957) target = $region76
        $region75: #{_lambda_.1} parent=67 // pred_region
          %v960 = vld [vmem:[#allocation2] sm:$0x1]
          %v961 = vmul.f32 %v960, 0.04761905
          %962 = vst.msk [vmem:[#allocation2] sm:$0x1] %vm954, %v961
        $region76: #{_lambda_.1} parent=67 // pred_fallthru
          _
      $region68: #{_lambda_.1} parent=63 // pred_fallthru
        _
      %p963 = scmp.eq.s32.totalorder %s28, 1
      // Predicated region
      $region77: #{_lambda_.1} parent=63 // pred_check
        %p964 = pneg %p963
      $region78: #{_lambda_.1} parent=63 // pred_check_branch
        %966 = sbr.rel (%p964) target = $region80
      $region79: #{_lambda_.1} parent=63 // pred_region
        %s967 = scalar_lea.vmem [#allocation4], %s420
        %v968 = vld [vmem:[%s967] sm:$0xff]
        %v969 = vld [vmem:[#allocation2] sm:$0x1]
        %v971 = vlaneseq
        %v972 = vshrl.u32 %v971, 7
        %v973 = vsub.s32 0, %v972
        %v974 = vrot.slane %v969, %v973
        %v976 = vsub.f32 %v968, %v974
        %v977 = vlaneseq
        %v978 = vshrl.u32 %v977, 7
        %v979 = vstv %s420
        %v980 = vadd.s32 %v979, %v978
        %vm981 = vcmp.lt.s32.totalorder %v980, 21
        %v982 = vsel %vm981, 1, 0
        %v983 = vcvt.s32.f32 %v982
        %v984 = vmul.f32 %v976, %v983
        %v985 = vld [vmem:[#allocation3] sm:$0x1]
        %v986 = vmul.f32 %v984, %v984
        %vm987 = vcmask 523264
        %v988 = vsel %vm987, %v986, 0.0
        %v989 = vrot.slane %v988, 4
        %v990 = vadd.f32 %v988, %v989
        %v991 = vrot.slane %v990, 2
        %v992 = vadd.f32 %v990, %v991
        %v993 = vrot.slane %v992, 1
        %v994 = vadd.f32 %v992, %v993
        %v995 = vadd.f32 %v985, %v994
        %vm996 = vcmask 516096
        %997 = vst.msk [vmem:[#allocation3] sm:$0x1] %vm996, %v995
        %p998 = scmp.eq.s32.totalorder %s29, 2
        // Predicated region
        $region81: #{_lambda_.1} parent=79 // pred_check
          %p999 = pneg %p998
        $region82: #{_lambda_.1} parent=79 // pred_check_branch
          %1001 = sbr.rel (%p999) target = $region84
        $region83: #{_lambda_.1} parent=79 // pred_region
          %v1002 = vld [vmem:[#allocation3] sm:$0x1]
          %v1003 = vmul.f32 %v1002, 0.04761905
          %v1004 = vadd.f32 %v1003, 1e-05
          %v1005 = vrsqrt.pop %v1004
          %1006 = vst.msk [vmem:[#allocation3] sm:$0x1] %vm996, %v1005
        $region84: #{_lambda_.1} parent=79 // pred_fallthru
          _
      $region80: #{_lambda_.1} parent=63 // pred_fallthru
        _
      %p1007 = scmp.eq.s32.totalorder %s28, 2
      // Predicated region
      $region85: #{_lambda_.1} parent=63 // pred_check
        %p1008 = pneg %p1007
      $region86: #{_lambda_.1} parent=63 // pred_check_branch
        %1010 = sbr.rel (%p1008) target = $region88
      $region87: #{_lambda_.1} parent=63 // pred_region
        %s1011 = scalar_lea.vmem [#allocation4], %s420
        %v1012 = vld [vmem:[%s1011] sm:$0xff]
        %v1013 = vld [vmem:[#allocation2] sm:$0x1]
        %v1015 = vlaneseq
        %v1016 = vshrl.u32 %v1015, 7
        %v1017 = vsub.s32 0, %v1016
        %v1018 = vrot.slane %v1013, %v1017
        %v1020 = vsub.f32 %v1012, %v1018
        %v1021 = vld [vmem:[#allocation3] sm:$0x1]
        %v1023 = vlaneseq
        %v1024 = vshrl.u32 %v1023, 7
        %v1025 = vsub.s32 0, %v1024
        %v1026 = vrot.slane %v1021, %v1025
        %v1028 = vmul.f32 %v1020, %v1026
        %v1029 = vld [vmem:[%s7] sm:$0x1]
        %v1031 = vlaneseq
        %v1032 = vshrl.u32 %v1031, 7
        %v1033 = vsub.s32 0, %v1032
        %v1034 = vrot.slane %v1029, %v1033
        %v1036 = vmul.f32 %v1028, %v1034
        %v1037 = vld [vmem:[%s8] sm:$0x1]
        %v1039 = vlaneseq
        %v1040 = vshrl.u32 %v1039, 7
        %v1041 = vsub.s32 0, %v1040
        %v1042 = vrot.slane %v1037, %v1041
        %v1044 = vadd.f32 %v1036, %v1042
        %vm1045 = vcmp.gt.f32.partialorder %v1044, 0.0
        %v1046 = vmul.f32 %v1044, 0.01
        %v1047 = vsel %vm1045, %v1044, %v1046
        %v1048 = vld [vmem:[%s9] sm:$0x1]
        %v1050 = vlaneseq
        %v1051 = vshrl.u32 %v1050, 7
        %v1052 = vsub.s32 0, %v1051
        %v1053 = vrot.slane %v1048, %v1052
        %v1055 = vmul.f32 %v1047, %v1053
        %vm1056 = vcmask 523264
        %v1057 = vsel %vm1056, %v1055, 0.0
        %1058 = vadd.xlane.f32.xlu0 %v1057
        %v1059 = vpop.xlane.xlu0 %1058
        %v1060 = vld [vmem:[#allocation5] sm:$0x1]
        %v1062 = vlaneseq
        %v1063 = vshrl.u32 %v1062, 7
        %v1064 = vsub.s32 0, %v1063
        %v1065 = vrot.slane %v1060, %v1064
        %v1067 = vadd.f32 %v1059, %v1065
        %v1068 = vtanh.pop %v1067
        %vm1069 = vcmask 7168
        %1070 = vst.msk [vmem:[%s417] sm:$0xff] %vm1069, %v1068
      $region88: #{_lambda_.1} parent=63 // pred_fallthru
        _
      %p1071 = scmp.eq.s32.totalorder %s28, 2
      %s1072 = scalar_select %p1071, %s29, 0
      %p1073 = scmp.lt.s32.totalorder %s1072, 2
      %s1074 = scalar_select %p1073, %s1072, 2
      %s1075 = smul.addr %s1074, 8
      %s1076 = scalar_lea.vmem %s11, %s1075
      // Predicated region
      $region89: #{_lambda_.1} parent=63 // pred_check
        %p1077 = pneg %p298
      $region90: #{_lambda_.1} parent=63 // pred_check_branch
        %1079 = sbr.rel (%p1077) target = $region92
      $region91: #{_lambda_.1} parent=63 // pred_region
        %p1080 = scmp.eq.s32.totalorder %s28, 2
        %s1081 = scalar_select %p1080, %s29, 0
      $region92: #{_lambda_.1} parent=63 // pred_fallthru
        _
    $region64: #{_lambda_.1} parent=5 // pred_fallthru
      _
    %p1082 = scmp.le.s32.totalorder 2, %s19
    // Predicated region
    $region93: #{_lambda_.1} parent=5 // pred_check
      %p1083 = pneg %p1082
    $region94: #{_lambda_.1} parent=5 // pred_check_branch
      %1085 = sbr.rel (%p1083) target = $region96
    $region95: #{_lambda_.1} parent=5 // pred_region
      %s1086 = ssub.s32 %s19, 2
      // Predicated region
      $region97: #{_lambda_.1} parent=95 // pred_check
        %p1087 = pneg %p304
      $region98: #{_lambda_.1} parent=95 // pred_check_branch
        %1089 = sbr.rel (%p1087) target = $region100
      $region99: #{_lambda_.1} parent=95 // pred_region
        %p1090 = scmp.eq.s32.totalorder %s30, 2
        %s1091 = scalar_select %p1090, %s31, 0
        %p1092 = scmp.lt.s32.totalorder %s1091, 2
        %s1093 = scalar_select %p1092, %s1091, 2
        %s1094 = smul.addr %s1093, 8
        %s1095 = scalar_lea.vmem %s11, %s1094
      $region100: #{_lambda_.1} parent=95 // pred_fallthru
        _
    $region96: #{_lambda_.1} parent=5 // pred_fallthru
      _
  $region6: #{_lambda_.1} parent=0 // loop_footer
    %s23 = sadd.s32 1, %s19
  $region7: #{_lambda_.1} parent=0 // loop_footer_branch
    %18 = sbr.rel target = $region3
  $region8: #{_lambda_.1} parent=0 // loop_exit
    _

</llo_original>
